<compile_context>
chip_gen: v5e
topology: v5e:2x2
jax: 0.10.0
libtpu: 0.0.40
codegen_flags: <defaults>
</compile_context>

<pallas_src>
import functools

import jax
import jax.numpy as jnp
import numpy as np
from jax.experimental import pallas as pl
from jax.experimental.pallas import tpu as pltpu

LEAKY_SLOPE = 0.01   # nn.LeakyReLU() default negative_slope
BN_EPS = 1e-5        # nn.BatchNorm2d default eps
LANE = 128           # TPU lane width


def _round_up(x, m):
    return (x + m - 1) // m * m


def _vmem_budget_and_limit():
    """Generation-aware VMEM numbers (budget for blocks, scoped limit)."""
    cap = None
    try:
        get_info = getattr(pltpu, "get_tpu_info", None)
        if get_info is not None:
            cap = getattr(get_info(), "vmem_capacity_bytes", None)
    except Exception:
        cap = None
    if not cap:
        cap = 64 * 1024 * 1024   # conservative default (v7x per-TensorCore)
    return int(cap * 0.40), int(cap * 0.70)


def _pick_tm(M, cin_t, coutp, out_itemsize, budget_bytes):
    """Pick the lane-dim tile over flattened spatial M (sublane/lane-rounded footprint)."""
    if M <= LANE:
        return M                                   # full-dim block (valid for any M)
    cin_r = _round_up(cin_t, 16)                   # bf16 sublane packing
    cout_r = _round_up(coutp, 8)
    per_col = (2 * 9 * cin_r * 2                   # tap block, double-buffered, bf16
               + 2 * cout_r * out_itemsize         # output block, double-buffered
               + 3 * cout_r * 4)                   # f32 acc + epilogue temporaries
    fixed = (9 * cout_r * _round_up(cin_t, LANE) * 2   # weights (lane-padded in VMEM)
             + 2 * cout_r * LANE * 4)                  # scale + shift
    tm = (budget_bytes - fixed) // max(per_col, 1)
    tm = max(LANE, min(int(tm), 2048))
    tm = (tm // LANE) * LANE
    tm = min(tm, _round_up(M, LANE))
    # keep >= ~8 M tiles so v7x's two TensorCores and the pipeline get multiple steps
    tm = min(tm, max(LANE, _round_up((M + 7) // 8, LANE)))
    return max(tm, LANE)


# ---------------------------------------------------------------------------
# Pallas kernel: 9-tap transposed GEMM + folded BN + LeakyReLU
#   taps_ref : (9, 1, Cin, TM)  bf16   (per-batch tap block, M on lanes)
#   w_ref    : (9, Coutp, Cin)  bf16   (per-tap weight slices, Cout on sublanes)
#   scale    : (Coutp, 1)       f32    gamma / sqrt(var + eps)
#   shift    : (Coutp, 1)       f32    beta - mean * scale
#   o_ref    : (1, Coutp, TM)   out_dtype
# ---------------------------------------------------------------------------
def _conv_tap_gemm_kernel(taps_ref, w_ref, scale_ref, shift_ref, o_ref):
    acc = None
    for t in range(taps_ref.shape[0]):             # unrolled 9-tap reduction (MXU dots)
        p = jnp.dot(w_ref[t], taps_ref[t, 0], preferred_element_type=jnp.float32)
        acc = p if acc is None else acc + p
    y = acc * scale_ref[...] + shift_ref[...]
    o_ref[0] = jnp.maximum(y, LEAKY_SLOPE * y).astype(o_ref.dtype)


# ---------------------------------------------------------------------------
# BasicConv (2D, 3x3, no bias) = Conv2d + BN(eval) + LeakyReLU, NCHW in/out.
# `xs` is a tuple of NCHW channel groups (their logical concat is the conv input,
# but the concatenated tensor is never materialized).
# ---------------------------------------------------------------------------
def conv3x3_bn_lrelu(xs, w_oihw, gamma, beta, mean, var, *, stride, padding,
                     out_dtype=jnp.float32):
    N, _, H, W = xs[0].shape
    cin_t = sum(int(x.shape[1]) for x in xs)
    Cout = int(w_oihw.shape[0])
    KH = KW = 3
    Ho = (H + 2 * padding - KH) // stride + 1
    Wo = (W + 2 * padding - KW) // stride + 1
    M = Ho * Wo
    coutp = _round_up(Cout, 8)   # sublane padding only (no-op for Cout = 8, 16, ...)

    # Spatial pad + bf16 cast of every channel group (halves tap HBM traffic).
    xps = [jnp.pad(x, ((0, 0), (0, 0), (padding, padding), (padding, padding))
                   ).astype(jnp.bfloat16) for x in xs]

    # Tap stack (9, N, Cin_total, M): the only materialized intermediate.
    taps = []
    for kh in range(KH):
        for kw in range(KW):
            parts = [xp[:, :, kh:kh + stride * (Ho - 1) + 1:stride,
                        kw:kw + stride * (Wo - 1) + 1:stride] for xp in xps]
            t = parts[0] if len(parts) == 1 else jnp.concatenate(parts, axis=1)
            taps.append(t.reshape(N, cin_t, M))
    taps = jnp.stack(taps, axis=0)

    # Per-tap weight slices: (9, Coutp, Cin_total), bf16.
    wt = jnp.transpose(w_oihw, (2, 3, 0, 1)).reshape(KH * KW, Cout, cin_t)
    wt = jnp.pad(wt, ((0, 0), (0, coutp - Cout), (0, 0))).astype(jnp.bfloat16)

    # Folded inference BatchNorm (f32).
    scale = (gamma / jnp.sqrt(var + BN_EPS)).astype(jnp.float32)
    shift = (beta - mean * scale).astype(jnp.float32)
    scale = jnp.pad(scale, (0, coutp - Cout)).reshape(coutp, 1)
    shift = jnp.pad(shift, (0, coutp - Cout)).reshape(coutp, 1)

    budget, vmem_limit = _vmem_budget_and_limit()
    out_itemsize = jnp.dtype(out_dtype).itemsize
    tm = _pick_tm(M, cin_t, coutp, out_itemsize, budget)
    n_m = (M + tm - 1) // tm

    cost = pl.CostEstimate(
        flops=2 * N * M * (KH * KW * cin_t) * coutp,
        transcendentals=0,
        bytes_accessed=(taps.size * 2 + wt.size * 2 + N * coutp * M * out_itemsize),
    )

    out = pl.pallas_call(
        _conv_tap_gemm_kernel,
        out_shape=jax.ShapeDtypeStruct((N, coutp, M), out_dtype),
        grid=(N, n_m),
        in_specs=[
            pl.BlockSpec((KH * KW, 1, cin_t, tm), lambda n, m: (0, n, 0, m)),
            pl.BlockSpec((KH * KW, coutp, cin_t), lambda n, m: (0, 0, 0)),
            pl.BlockSpec((coutp, 1), lambda n, m: (0, 0)),
            pl.BlockSpec((coutp, 1), lambda n, m: (0, 0)),
        ],
        out_specs=pl.BlockSpec((1, coutp, tm), lambda n, m: (n, 0, m)),
        compiler_params=pltpu.CompilerParams(
            dimension_semantics=("parallel", "parallel"),
            vmem_limit_bytes=vmem_limit,
        ),
        cost_estimate=cost,
    )(taps, wt, scale, shift)

    if coutp != Cout:
        out = out[:, :Cout]
    return out.reshape(N, Cout, Ho, Wo)   # already NCHW


def _nearest_resize_nchw(x, out_h, out_w):
    # matches F.interpolate(mode='nearest'): src_idx = floor(dst_idx * in/out)
    N, C, H, W = x.shape
    hi = (jnp.arange(out_h) * H // out_h).astype(jnp.int32)
    wi = (jnp.arange(out_w) * W // out_w).astype(jnp.int32)
    return x[:, :, hi[:, None], wi[None, :]]


# ---------------------------------------------------------------------------
# Conv2x forward (NCHW end to end)
# ---------------------------------------------------------------------------
def conv2x_forward(params, x, rem):
    y = conv3x3_bn_lrelu((x,), params["w1"], params["g1"], params["b1"],
                         params["m1"], params["v1"], stride=2, padding=1,
                         out_dtype=jnp.bfloat16)          # bf16 intermediate
    if y.shape[2:] != rem.shape[2:]:
        y = _nearest_resize_nchw(y, rem.shape[2], rem.shape[3])
    # concat=True: the channel concat [y, rem] is folded into conv2's tap build.
    out = conv3x3_bn_lrelu((y, rem), params["w2"], params["g2"], params["b2"],
                           params["m2"], params["v2"], stride=1, padding=1,
                           out_dtype=jnp.float32)
    return out


def init_params(key, in_ch, out_ch):
    ks = jax.random.split(key, 10)
    c2 = 2 * out_ch
    return {
        "w1": jax.random.normal(ks[0], (out_ch, in_ch, 3, 3), jnp.float32)
              / np.sqrt(in_ch * 9),
        "g1": 1.0 + 0.1 * jax.random.normal(ks[1], (out_ch,), jnp.float32),
        "b1": 0.1 * jax.random.normal(ks[2], (out_ch,), jnp.float32),
        "m1": 0.1 * jax.random.normal(ks[3], (out_ch,), jnp.float32),
        "v1": jax.random.uniform(ks[4], (out_ch,), jnp.float32, 0.5, 1.5),
        "w2": jax.random.normal(ks[5], (c2, c2, 3, 3), jnp.float32)
              / np.sqrt(c2 * 9),
        "g2": 1.0 + 0.1 * jax.random.normal(ks[6], (c2,), jnp.float32),
        "b2": 0.1 * jax.random.normal(ks[7], (c2,), jnp.float32),
        "m2": 0.1 * jax.random.normal(ks[8], (c2,), jnp.float32),
        "v2": jax.random.uniform(ks[9], (c2,), jnp.float32, 0.5, 1.5),
    }


# ---------------------------------------------------------------------------
# Pure-JAX reference (f32 everywhere)
# ---------------------------------------------------------------------------
def _ref_conv_bn_lrelu(x, w, gamma, beta, mean, var, stride, padding):
    y = jax.lax.conv_general_dilated(
        x, w, (stride, stride), ((padding, padding), (padding, padding)),
        dimension_numbers=("NCHW", "OIHW", "NCHW"))
    scale = (gamma / jnp.sqrt(var + BN_EPS))[None, :, None, None]
    shift = (beta - mean * gamma / jnp.sqrt(var + BN_EPS))[None, :, None, None]
    y = y * scale + shift
    return jnp.where(y >= 0, y, LEAKY_SLOPE * y)


def _ref_conv2x(params, x, rem):
    y = _ref_conv_bn_lrelu(x, params["w1"], params["g1"], params["b1"],
                           params["m1"], params["v1"], 2, 1)
    y = jnp.concatenate([y, rem], axis=1)
    return _ref_conv_bn_lrelu(y, params["w2"], params["g2"], params["b2"],
                              params["m2"], params["v2"], 1, 1)


if __name__ == "__main__":
    key = jax.random.PRNGKey(0)
    kx, kr, kp = jax.random.split(key, 3)

    in_ch, out_ch = 4, 8
    N, H, W = 2, 16, 16
    x = jax.random.normal(kx, (N, in_ch, H, W), jnp.float32)
    rem = jax.random.normal(kr, (N, out_ch, H // 2, W // 2), jnp.float32)
    params = init_params(kp, in_ch, out_ch)

    fwd = jax.jit(functools.partial(conv2x_forward, params))
    out = jax.block_until_ready(fwd(x, rem))

    assert out.shape == (N, 2 * out_ch, H // 2, W // 2), out.shape

    ref = jax.block_until_ready(_ref_conv2x(params, x, rem))
    # bf16 MXU operands + bf16 conv1 intermediate (f32 accumulate) vs f32 reference.
    np.testing.assert_allclose(np.asarray(out), np.asarray(ref),
                               rtol=5e-2, atol=5e-2)

    print("KERNEL_OK")
</pallas_src>

<mosaic_0001>
module attributes {stable_mosaic.version = 11 : i64} {
  func.func @_conv_tap_gemm_kernel(%arg0: i32, %arg1: i32, %arg2: memref<9x1x4x64xbf16, #tpu.memory_space<vmem>>, %arg3: memref<9x8x4xbf16, #tpu.memory_space<vmem>>, %arg4: memref<8x1xf32, #tpu.memory_space<vmem>>, %arg5: memref<8x1xf32, #tpu.memory_space<vmem>>, %arg6: memref<1x8x64xbf16, #tpu.memory_space<vmem>>) attributes {dimension_semantics = [#tpu.dimension_semantics<parallel>, #tpu.dimension_semantics<parallel>], iteration_bounds = array<i64: 2, 1>, scalar_prefetch = 0 : i64, scratch_operands = 0 : i64, tpu.core_type = #tpu.core_type<tc>, window_params = [{transform_indices = @transform_0, window_bounds = array<i64: 9, 1, 4, 64>}, {pipeline_mode = #tpu.pipeline_mode<synchronous>, transform_indices = @transform_1, window_bounds = array<i64: 9, 8, 4>}, {pipeline_mode = #tpu.pipeline_mode<synchronous>, transform_indices = @transform_2, window_bounds = array<i64: 8, 1>}, {pipeline_mode = #tpu.pipeline_mode<synchronous>, transform_indices = @transform_3, window_bounds = array<i64: 8, 1>}, {transform_indices = @transform_4, window_bounds = array<i64: 1, 8, 64>}]} {
    %c0 = arith.constant 0 : index
    %c0_0 = arith.constant 0 : index
    %c0_1 = arith.constant 0 : index
    %0 = vector.load %arg3[%c0, %c0_0, %c0_1] : memref<9x8x4xbf16, #tpu.memory_space<vmem>>, vector<1x8x4xbf16>
    %1 = vector.shape_cast %0 : vector<1x8x4xbf16> to vector<8x4xbf16>
    %c0_2 = arith.constant 0 : index
    %c0_3 = arith.constant 0 : index
    %c0_4 = arith.constant 0 : index
    %c0_5 = arith.constant 0 : index
    %2 = vector.load %arg2[%c0_2, %c0_3, %c0_4, %c0_5] : memref<9x1x4x64xbf16, #tpu.memory_space<vmem>>, vector<1x1x4x64xbf16>
    %3 = vector.shape_cast %2 : vector<1x1x4x64xbf16> to vector<4x64xbf16>
    %cst = arith.constant dense<0.000000e+00> : vector<8x64xf32>
    %4 = tpu.matmul %1, %3, %cst {dimension_numbers = #tpu.dot_dimension_numbers<[1], [0], [0], [1], [0, 0, 1, 1], [], []>} : vector<8x4xbf16>, vector<4x64xbf16>, vector<8x64xf32> -> vector<8x64xf32>
    %c1 = arith.constant 1 : index
    %c0_6 = arith.constant 0 : index
    %c0_7 = arith.constant 0 : index
    %5 = vector.load %arg3[%c1, %c0_6, %c0_7] : memref<9x8x4xbf16, #tpu.memory_space<vmem>>, vector<1x8x4xbf16>
    %6 = vector.shape_cast %5 : vector<1x8x4xbf16> to vector<8x4xbf16>
    %c1_8 = arith.constant 1 : index
    %c0_9 = arith.constant 0 : index
    %c0_10 = arith.constant 0 : index
    %c0_11 = arith.constant 0 : index
    %7 = vector.load %arg2[%c1_8, %c0_9, %c0_10, %c0_11] : memref<9x1x4x64xbf16, #tpu.memory_space<vmem>>, vector<1x1x4x64xbf16>
    %8 = vector.shape_cast %7 : vector<1x1x4x64xbf16> to vector<4x64xbf16>
    %cst_12 = arith.constant dense<0.000000e+00> : vector<8x64xf32>
    %9 = tpu.matmul %6, %8, %cst_12 {dimension_numbers = #tpu.dot_dimension_numbers<[1], [0], [0], [1], [0, 0, 1, 1], [], []>} : vector<8x4xbf16>, vector<4x64xbf16>, vector<8x64xf32> -> vector<8x64xf32>
    %10 = arith.addf %4, %9 : vector<8x64xf32>
    %c2 = arith.constant 2 : index
    %c0_13 = arith.constant 0 : index
    %c0_14 = arith.constant 0 : index
    %11 = vector.load %arg3[%c2, %c0_13, %c0_14] : memref<9x8x4xbf16, #tpu.memory_space<vmem>>, vector<1x8x4xbf16>
    %12 = vector.shape_cast %11 : vector<1x8x4xbf16> to vector<8x4xbf16>
    %c2_15 = arith.constant 2 : index
    %c0_16 = arith.constant 0 : index
    %c0_17 = arith.constant 0 : index
    %c0_18 = arith.constant 0 : index
    %13 = vector.load %arg2[%c2_15, %c0_16, %c0_17, %c0_18] : memref<9x1x4x64xbf16, #tpu.memory_space<vmem>>, vector<1x1x4x64xbf16>
    %14 = vector.shape_cast %13 : vector<1x1x4x64xbf16> to vector<4x64xbf16>
    %cst_19 = arith.constant dense<0.000000e+00> : vector<8x64xf32>
    %15 = tpu.matmul %12, %14, %cst_19 {dimension_numbers = #tpu.dot_dimension_numbers<[1], [0], [0], [1], [0, 0, 1, 1], [], []>} : vector<8x4xbf16>, vector<4x64xbf16>, vector<8x64xf32> -> vector<8x64xf32>
    %16 = arith.addf %10, %15 : vector<8x64xf32>
    %c3 = arith.constant 3 : index
    %c0_20 = arith.constant 0 : index
    %c0_21 = arith.constant 0 : index
    %17 = vector.load %arg3[%c3, %c0_20, %c0_21] : memref<9x8x4xbf16, #tpu.memory_space<vmem>>, vector<1x8x4xbf16>
    %18 = vector.shape_cast %17 : vector<1x8x4xbf16> to vector<8x4xbf16>
    %c3_22 = arith.constant 3 : index
    %c0_23 = arith.constant 0 : index
    %c0_24 = arith.constant 0 : index
    %c0_25 = arith.constant 0 : index
    %19 = vector.load %arg2[%c3_22, %c0_23, %c0_24, %c0_25] : memref<9x1x4x64xbf16, #tpu.memory_space<vmem>>, vector<1x1x4x64xbf16>
    %20 = vector.shape_cast %19 : vector<1x1x4x64xbf16> to vector<4x64xbf16>
    %cst_26 = arith.constant dense<0.000000e+00> : vector<8x64xf32>
    %21 = tpu.matmul %18, %20, %cst_26 {dimension_numbers = #tpu.dot_dimension_numbers<[1], [0], [0], [1], [0, 0, 1, 1], [], []>} : vector<8x4xbf16>, vector<4x64xbf16>, vector<8x64xf32> -> vector<8x64xf32>
    %22 = arith.addf %16, %21 : vector<8x64xf32>
    %c4 = arith.constant 4 : index
    %c0_27 = arith.constant 0 : index
    %c0_28 = arith.constant 0 : index
    %23 = vector.load %arg3[%c4, %c0_27, %c0_28] : memref<9x8x4xbf16, #tpu.memory_space<vmem>>, vector<1x8x4xbf16>
    %24 = vector.shape_cast %23 : vector<1x8x4xbf16> to vector<8x4xbf16>
    %c4_29 = arith.constant 4 : index
    %c0_30 = arith.constant 0 : index
    %c0_31 = arith.constant 0 : index
    %c0_32 = arith.constant 0 : index
    %25 = vector.load %arg2[%c4_29, %c0_30, %c0_31, %c0_32] : memref<9x1x4x64xbf16, #tpu.memory_space<vmem>>, vector<1x1x4x64xbf16>
    %26 = vector.shape_cast %25 : vector<1x1x4x64xbf16> to vector<4x64xbf16>
    %cst_33 = arith.constant dense<0.000000e+00> : vector<8x64xf32>
    %27 = tpu.matmul %24, %26, %cst_33 {dimension_numbers = #tpu.dot_dimension_numbers<[1], [0], [0], [1], [0, 0, 1, 1], [], []>} : vector<8x4xbf16>, vector<4x64xbf16>, vector<8x64xf32> -> vector<8x64xf32>
    %28 = arith.addf %22, %27 : vector<8x64xf32>
    %c5 = arith.constant 5 : index
    %c0_34 = arith.constant 0 : index
    %c0_35 = arith.constant 0 : index
    %29 = vector.load %arg3[%c5, %c0_34, %c0_35] : memref<9x8x4xbf16, #tpu.memory_space<vmem>>, vector<1x8x4xbf16>
    %30 = vector.shape_cast %29 : vector<1x8x4xbf16> to vector<8x4xbf16>
    %c5_36 = arith.constant 5 : index
    %c0_37 = arith.constant 0 : index
    %c0_38 = arith.constant 0 : index
    %c0_39 = arith.constant 0 : index
    %31 = vector.load %arg2[%c5_36, %c0_37, %c0_38, %c0_39] : memref<9x1x4x64xbf16, #tpu.memory_space<vmem>>, vector<1x1x4x64xbf16>
    %32 = vector.shape_cast %31 : vector<1x1x4x64xbf16> to vector<4x64xbf16>
    %cst_40 = arith.constant dense<0.000000e+00> : vector<8x64xf32>
    %33 = tpu.matmul %30, %32, %cst_40 {dimension_numbers = #tpu.dot_dimension_numbers<[1], [0], [0], [1], [0, 0, 1, 1], [], []>} : vector<8x4xbf16>, vector<4x64xbf16>, vector<8x64xf32> -> vector<8x64xf32>
    %34 = arith.addf %28, %33 : vector<8x64xf32>
    %c6 = arith.constant 6 : index
    %c0_41 = arith.constant 0 : index
    %c0_42 = arith.constant 0 : index
    %35 = vector.load %arg3[%c6, %c0_41, %c0_42] : memref<9x8x4xbf16, #tpu.memory_space<vmem>>, vector<1x8x4xbf16>
    %36 = vector.shape_cast %35 : vector<1x8x4xbf16> to vector<8x4xbf16>
    %c6_43 = arith.constant 6 : index
    %c0_44 = arith.constant 0 : index
    %c0_45 = arith.constant 0 : index
    %c0_46 = arith.constant 0 : index
    %37 = vector.load %arg2[%c6_43, %c0_44, %c0_45, %c0_46] : memref<9x1x4x64xbf16, #tpu.memory_space<vmem>>, vector<1x1x4x64xbf16>
    %38 = vector.shape_cast %37 : vector<1x1x4x64xbf16> to vector<4x64xbf16>
    %cst_47 = arith.constant dense<0.000000e+00> : vector<8x64xf32>
    %39 = tpu.matmul %36, %38, %cst_47 {dimension_numbers = #tpu.dot_dimension_numbers<[1], [0], [0], [1], [0, 0, 1, 1], [], []>} : vector<8x4xbf16>, vector<4x64xbf16>, vector<8x64xf32> -> vector<8x64xf32>
    %40 = arith.addf %34, %39 : vector<8x64xf32>
    %c7 = arith.constant 7 : index
    %c0_48 = arith.constant 0 : index
    %c0_49 = arith.constant 0 : index
    %41 = vector.load %arg3[%c7, %c0_48, %c0_49] : memref<9x8x4xbf16, #tpu.memory_space<vmem>>, vector<1x8x4xbf16>
    %42 = vector.shape_cast %41 : vector<1x8x4xbf16> to vector<8x4xbf16>
    %c7_50 = arith.constant 7 : index
    %c0_51 = arith.constant 0 : index
    %c0_52 = arith.constant 0 : index
    %c0_53 = arith.constant 0 : index
    %43 = vector.load %arg2[%c7_50, %c0_51, %c0_52, %c0_53] : memref<9x1x4x64xbf16, #tpu.memory_space<vmem>>, vector<1x1x4x64xbf16>
    %44 = vector.shape_cast %43 : vector<1x1x4x64xbf16> to vector<4x64xbf16>
    %cst_54 = arith.constant dense<0.000000e+00> : vector<8x64xf32>
    %45 = tpu.matmul %42, %44, %cst_54 {dimension_numbers = #tpu.dot_dimension_numbers<[1], [0], [0], [1], [0, 0, 1, 1], [], []>} : vector<8x4xbf16>, vector<4x64xbf16>, vector<8x64xf32> -> vector<8x64xf32>
    %46 = arith.addf %40, %45 : vector<8x64xf32>
    %c8 = arith.constant 8 : index
    %c0_55 = arith.constant 0 : index
    %c0_56 = arith.constant 0 : index
    %47 = vector.load %arg3[%c8, %c0_55, %c0_56] : memref<9x8x4xbf16, #tpu.memory_space<vmem>>, vector<1x8x4xbf16>
    %48 = vector.shape_cast %47 : vector<1x8x4xbf16> to vector<8x4xbf16>
    %c8_57 = arith.constant 8 : index
    %c0_58 = arith.constant 0 : index
    %c0_59 = arith.constant 0 : index
    %c0_60 = arith.constant 0 : index
    %49 = vector.load %arg2[%c8_57, %c0_58, %c0_59, %c0_60] : memref<9x1x4x64xbf16, #tpu.memory_space<vmem>>, vector<1x1x4x64xbf16>
    %50 = vector.shape_cast %49 : vector<1x1x4x64xbf16> to vector<4x64xbf16>
    %cst_61 = arith.constant dense<0.000000e+00> : vector<8x64xf32>
    %51 = tpu.matmul %48, %50, %cst_61 {dimension_numbers = #tpu.dot_dimension_numbers<[1], [0], [0], [1], [0, 0, 1, 1], [], []>} : vector<8x4xbf16>, vector<4x64xbf16>, vector<8x64xf32> -> vector<8x64xf32>
    %52 = arith.addf %46, %51 : vector<8x64xf32>
    %c0_62 = arith.constant 0 : index
    %c0_63 = arith.constant 0 : index
    %53 = vector.load %arg4[%c0_62, %c0_63] : memref<8x1xf32, #tpu.memory_space<vmem>>, vector<8x1xf32>
    %54 = vector.broadcast %53 : vector<8x1xf32> to vector<8x64xf32>
    %55 = arith.mulf %52, %54 : vector<8x64xf32>
    %c0_64 = arith.constant 0 : index
    %c0_65 = arith.constant 0 : index
    %56 = vector.load %arg5[%c0_64, %c0_65] : memref<8x1xf32, #tpu.memory_space<vmem>>, vector<8x1xf32>
    %57 = vector.broadcast %56 : vector<8x1xf32> to vector<8x64xf32>
    %58 = arith.addf %55, %57 : vector<8x64xf32>
    %cst_66 = arith.constant 0.00999999977 : f32
    %59 = vector.broadcast %cst_66 : f32 to vector<8x64xf32>
    %60 = arith.mulf %59, %58 : vector<8x64xf32>
    %61 = arith.maximumf %58, %60 : vector<8x64xf32>
    %62 = arith.truncf %61 : vector<8x64xf32> to vector<8x64xbf16>
    %c0_67 = arith.constant 0 : index
    %c0_68 = arith.constant 0 : index
    %c0_69 = arith.constant 0 : index
    %63 = vector.load %arg6[%c0_67, %c0_68, %c0_69] : memref<1x8x64xbf16, #tpu.memory_space<vmem>>, vector<1x8x64xbf16>
    %64 = vector.shape_cast %63 : vector<1x8x64xbf16> to vector<8x64xbf16>
    %65 = vector.shape_cast %62 : vector<8x64xbf16> to vector<1x8x64xbf16>
    tpu.vector_store %arg6[%c0_67, %c0_68, %c0_69], %65 {strides = array<i32>} : memref<1x8x64xbf16, #tpu.memory_space<vmem>>, vector<1x8x64xbf16>,
    return
  }
  func.func @transform_0(%arg0: i32, %arg1: i32) -> (i32, i32, i32, i32) {
    %c0_i32 = arith.constant 0 : i32
    %c0_i32_0 = arith.constant 0 : i32
    %c0_i32_1 = arith.constant 0 : i32
    return %c0_i32, %arg0, %c0_i32_0, %arg1 : i32, i32, i32, i32
  }
  func.func @transform_1(%arg0: i32, %arg1: i32) -> (i32, i32, i32) {
    %c0_i32 = arith.constant 0 : i32
    %c0_i32_0 = arith.constant 0 : i32
    %c0_i32_1 = arith.constant 0 : i32
    %c0_i32_2 = arith.constant 0 : i32
    return %c0_i32, %c0_i32_0, %c0_i32_1 : i32, i32, i32
  }
  func.func @transform_2(%arg0: i32, %arg1: i32) -> (i32, i32) {
    %c0_i32 = arith.constant 0 : i32
    %c0_i32_0 = arith.constant 0 : i32
    %c0_i32_1 = arith.constant 0 : i32
    return %c0_i32, %c0_i32_0 : i32, i32
  }
  func.func @transform_3(%arg0: i32, %arg1: i32) -> (i32, i32) {
    %c0_i32 = arith.constant 0 : i32
    %c0_i32_0 = arith.constant 0 : i32
    %c0_i32_1 = arith.constant 0 : i32
    return %c0_i32, %c0_i32_0 : i32, i32
  }
  func.func @transform_4(%arg0: i32, %arg1: i32) -> (i32, i32, i32) {
    %c0_i32 = arith.constant 0 : i32
    %c0_i32_0 = arith.constant 0 : i32
    return %arg0, %c0_i32, %arg1 : i32, i32, i32
  }
}

module attributes {stable_mosaic.version = 11 : i64} {
  func.func @_conv_tap_gemm_kernel(%arg0: i32, %arg1: i32, %arg2: memref<9x1x16x64xbf16, #tpu.memory_space<vmem>>, %arg3: memref<9x16x16xbf16, #tpu.memory_space<vmem>>, %arg4: memref<16x1xf32, #tpu.memory_space<vmem>>, %arg5: memref<16x1xf32, #tpu.memory_space<vmem>>, %arg6: memref<1x16x64xf32, #tpu.memory_space<vmem>>) attributes {dimension_semantics = [#tpu.dimension_semantics<parallel>, #tpu.dimension_semantics<parallel>], iteration_bounds = array<i64: 2, 1>, scalar_prefetch = 0 : i64, scratch_operands = 0 : i64, tpu.core_type = #tpu.core_type<tc>, window_params = [{transform_indices = @transform_0, window_bounds = array<i64: 9, 1, 16, 64>}, {pipeline_mode = #tpu.pipeline_mode<synchronous>, transform_indices = @transform_1, window_bounds = array<i64: 9, 16, 16>}, {pipeline_mode = #tpu.pipeline_mode<synchronous>, transform_indices = @transform_2, window_bounds = array<i64: 16, 1>}, {pipeline_mode = #tpu.pipeline_mode<synchronous>, transform_indices = @transform_3, window_bounds = array<i64: 16, 1>}, {transform_indices = @transform_4, window_bounds = array<i64: 1, 16, 64>}]} {
    %c0 = arith.constant 0 : index
    %c0_0 = arith.constant 0 : index
    %c0_1 = arith.constant 0 : index
    %0 = vector.load %arg3[%c0, %c0_0, %c0_1] : memref<9x16x16xbf16, #tpu.memory_space<vmem>>, vector<1x16x16xbf16>
    %1 = vector.shape_cast %0 : vector<1x16x16xbf16> to vector<16x16xbf16>
    %c0_2 = arith.constant 0 : index
    %c0_3 = arith.constant 0 : index
    %c0_4 = arith.constant 0 : index
    %c0_5 = arith.constant 0 : index
    %2 = vector.load %arg2[%c0_2, %c0_3, %c0_4, %c0_5] : memref<9x1x16x64xbf16, #tpu.memory_space<vmem>>, vector<1x1x16x64xbf16>
    %3 = vector.shape_cast %2 : vector<1x1x16x64xbf16> to vector<16x64xbf16>
    %cst = arith.constant dense<0.000000e+00> : vector<16x64xf32>
    %4 = tpu.matmul %1, %3, %cst {dimension_numbers = #tpu.dot_dimension_numbers<[1], [0], [0], [1], [0, 0, 1, 1], [], []>} : vector<16x16xbf16>, vector<16x64xbf16>, vector<16x64xf32> -> vector<16x64xf32>
    %c1 = arith.constant 1 : index
    %c0_6 = arith.constant 0 : index
    %c0_7 = arith.constant 0 : index
    %5 = vector.load %arg3[%c1, %c0_6, %c0_7] : memref<9x16x16xbf16, #tpu.memory_space<vmem>>, vector<1x16x16xbf16>
    %6 = vector.shape_cast %5 : vector<1x16x16xbf16> to vector<16x16xbf16>
    %c1_8 = arith.constant 1 : index
    %c0_9 = arith.constant 0 : index
    %c0_10 = arith.constant 0 : index
    %c0_11 = arith.constant 0 : index
    %7 = vector.load %arg2[%c1_8, %c0_9, %c0_10, %c0_11] : memref<9x1x16x64xbf16, #tpu.memory_space<vmem>>, vector<1x1x16x64xbf16>
    %8 = vector.shape_cast %7 : vector<1x1x16x64xbf16> to vector<16x64xbf16>
    %cst_12 = arith.constant dense<0.000000e+00> : vector<16x64xf32>
    %9 = tpu.matmul %6, %8, %cst_12 {dimension_numbers = #tpu.dot_dimension_numbers<[1], [0], [0], [1], [0, 0, 1, 1], [], []>} : vector<16x16xbf16>, vector<16x64xbf16>, vector<16x64xf32> -> vector<16x64xf32>
    %10 = arith.addf %4, %9 : vector<16x64xf32>
    %c2 = arith.constant 2 : index
    %c0_13 = arith.constant 0 : index
    %c0_14 = arith.constant 0 : index
    %11 = vector.load %arg3[%c2, %c0_13, %c0_14] : memref<9x16x16xbf16, #tpu.memory_space<vmem>>, vector<1x16x16xbf16>
    %12 = vector.shape_cast %11 : vector<1x16x16xbf16> to vector<16x16xbf16>
    %c2_15 = arith.constant 2 : index
    %c0_16 = arith.constant 0 : index
    %c0_17 = arith.constant 0 : index
    %c0_18 = arith.constant 0 : index
    %13 = vector.load %arg2[%c2_15, %c0_16, %c0_17, %c0_18] : memref<9x1x16x64xbf16, #tpu.memory_space<vmem>>, vector<1x1x16x64xbf16>
    %14 = vector.shape_cast %13 : vector<1x1x16x64xbf16> to vector<16x64xbf16>
    %cst_19 = arith.constant dense<0.000000e+00> : vector<16x64xf32>
    %15 = tpu.matmul %12, %14, %cst_19 {dimension_numbers = #tpu.dot_dimension_numbers<[1], [0], [0], [1], [0, 0, 1, 1], [], []>} : vector<16x16xbf16>, vector<16x64xbf16>, vector<16x64xf32> -> vector<16x64xf32>
    %16 = arith.addf %10, %15 : vector<16x64xf32>
    %c3 = arith.constant 3 : index
    %c0_20 = arith.constant 0 : index
    %c0_21 = arith.constant 0 : index
    %17 = vector.load %arg3[%c3, %c0_20, %c0_21] : memref<9x16x16xbf16, #tpu.memory_space<vmem>>, vector<1x16x16xbf16>
    %18 = vector.shape_cast %17 : vector<1x16x16xbf16> to vector<16x16xbf16>
    %c3_22 = arith.constant 3 : index
    %c0_23 = arith.constant 0 : index
    %c0_24 = arith.constant 0 : index
    %c0_25 = arith.constant 0 : index
    %19 = vector.load %arg2[%c3_22, %c0_23, %c0_24, %c0_25] : memref<9x1x16x64xbf16, #tpu.memory_space<vmem>>, vector<1x1x16x64xbf16>
    %20 = vector.shape_cast %19 : vector<1x1x16x64xbf16> to vector<16x64xbf16>
    %cst_26 = arith.constant dense<0.000000e+00> : vector<16x64xf32>
    %21 = tpu.matmul %18, %20, %cst_26 {dimension_numbers = #tpu.dot_dimension_numbers<[1], [0], [0], [1], [0, 0, 1, 1], [], []>} : vector<16x16xbf16>, vector<16x64xbf16>, vector<16x64xf32> -> vector<16x64xf32>
    %22 = arith.addf %16, %21 : vector<16x64xf32>
    %c4 = arith.constant 4 : index
    %c0_27 = arith.constant 0 : index
    %c0_28 = arith.constant 0 : index
    %23 = vector.load %arg3[%c4, %c0_27, %c0_28] : memref<9x16x16xbf16, #tpu.memory_space<vmem>>, vector<1x16x16xbf16>
    %24 = vector.shape_cast %23 : vector<1x16x16xbf16> to vector<16x16xbf16>
    %c4_29 = arith.constant 4 : index
    %c0_30 = arith.constant 0 : index
    %c0_31 = arith.constant 0 : index
    %c0_32 = arith.constant 0 : index
    %25 = vector.load %arg2[%c4_29, %c0_30, %c0_31, %c0_32] : memref<9x1x16x64xbf16, #tpu.memory_space<vmem>>, vector<1x1x16x64xbf16>
    %26 = vector.shape_cast %25 : vector<1x1x16x64xbf16> to vector<16x64xbf16>
    %cst_33 = arith.constant dense<0.000000e+00> : vector<16x64xf32>
    %27 = tpu.matmul %24, %26, %cst_33 {dimension_numbers = #tpu.dot_dimension_numbers<[1], [0], [0], [1], [0, 0, 1, 1], [], []>} : vector<16x16xbf16>, vector<16x64xbf16>, vector<16x64xf32> -> vector<16x64xf32>
    %28 = arith.addf %22, %27 : vector<16x64xf32>
    %c5 = arith.constant 5 : index
    %c0_34 = arith.constant 0 : index
    %c0_35 = arith.constant 0 : index
    %29 = vector.load %arg3[%c5, %c0_34, %c0_35] : memref<9x16x16xbf16, #tpu.memory_space<vmem>>, vector<1x16x16xbf16>
    %30 = vector.shape_cast %29 : vector<1x16x16xbf16> to vector<16x16xbf16>
    %c5_36 = arith.constant 5 : index
    %c0_37 = arith.constant 0 : index
    %c0_38 = arith.constant 0 : index
    %c0_39 = arith.constant 0 : index
    %31 = vector.load %arg2[%c5_36, %c0_37, %c0_38, %c0_39] : memref<9x1x16x64xbf16, #tpu.memory_space<vmem>>, vector<1x1x16x64xbf16>
    %32 = vector.shape_cast %31 : vector<1x1x16x64xbf16> to vector<16x64xbf16>
    %cst_40 = arith.constant dense<0.000000e+00> : vector<16x64xf32>
    %33 = tpu.matmul %30, %32, %cst_40 {dimension_numbers = #tpu.dot_dimension_numbers<[1], [0], [0], [1], [0, 0, 1, 1], [], []>} : vector<16x16xbf16>, vector<16x64xbf16>, vector<16x64xf32> -> vector<16x64xf32>
    %34 = arith.addf %28, %33 : vector<16x64xf32>
    %c6 = arith.constant 6 : index
    %c0_41 = arith.constant 0 : index
    %c0_42 = arith.constant 0 : index
    %35 = vector.load %arg3[%c6, %c0_41, %c0_42] : memref<9x16x16xbf16, #tpu.memory_space<vmem>>, vector<1x16x16xbf16>
    %36 = vector.shape_cast %35 : vector<1x16x16xbf16> to vector<16x16xbf16>
    %c6_43 = arith.constant 6 : index
    %c0_44 = arith.constant 0 : index
    %c0_45 = arith.constant 0 : index
    %c0_46 = arith.constant 0 : index
    %37 = vector.load %arg2[%c6_43, %c0_44, %c0_45, %c0_46] : memref<9x1x16x64xbf16, #tpu.memory_space<vmem>>, vector<1x1x16x64xbf16>
    %38 = vector.shape_cast %37 : vector<1x1x16x64xbf16> to vector<16x64xbf16>
    %cst_47 = arith.constant dense<0.000000e+00> : vector<16x64xf32>
    %39 = tpu.matmul %36, %38, %cst_47 {dimension_numbers = #tpu.dot_dimension_numbers<[1], [0], [0], [1], [0, 0, 1, 1], [], []>} : vector<16x16xbf16>, vector<16x64xbf16>, vector<16x64xf32> -> vector<16x64xf32>
    %40 = arith.addf %34, %39 : vector<16x64xf32>
    %c7 = arith.constant 7 : index
    %c0_48 = arith.constant 0 : index
    %c0_49 = arith.constant 0 : index
    %41 = vector.load %arg3[%c7, %c0_48, %c0_49] : memref<9x16x16xbf16, #tpu.memory_space<vmem>>, vector<1x16x16xbf16>
    %42 = vector.shape_cast %41 : vector<1x16x16xbf16> to vector<16x16xbf16>
    %c7_50 = arith.constant 7 : index
    %c0_51 = arith.constant 0 : index
    %c0_52 = arith.constant 0 : index
    %c0_53 = arith.constant 0 : index
    %43 = vector.load %arg2[%c7_50, %c0_51, %c0_52, %c0_53] : memref<9x1x16x64xbf16, #tpu.memory_space<vmem>>, vector<1x1x16x64xbf16>
    %44 = vector.shape_cast %43 : vector<1x1x16x64xbf16> to vector<16x64xbf16>
    %cst_54 = arith.constant dense<0.000000e+00> : vector<16x64xf32>
    %45 = tpu.matmul %42, %44, %cst_54 {dimension_numbers = #tpu.dot_dimension_numbers<[1], [0], [0], [1], [0, 0, 1, 1], [], []>} : vector<16x16xbf16>, vector<16x64xbf16>, vector<16x64xf32> -> vector<16x64xf32>
    %46 = arith.addf %40, %45 : vector<16x64xf32>
    %c8 = arith.constant 8 : index
    %c0_55 = arith.constant 0 : index
    %c0_56 = arith.constant 0 : index
    %47 = vector.load %arg3[%c8, %c0_55, %c0_56] : memref<9x16x16xbf16, #tpu.memory_space<vmem>>, vector<1x16x16xbf16>
    %48 = vector.shape_cast %47 : vector<1x16x16xbf16> to vector<16x16xbf16>
    %c8_57 = arith.constant 8 : index
    %c0_58 = arith.constant 0 : index
    %c0_59 = arith.constant 0 : index
    %c0_60 = arith.constant 0 : index
    %49 = vector.load %arg2[%c8_57, %c0_58, %c0_59, %c0_60] : memref<9x1x16x64xbf16, #tpu.memory_space<vmem>>, vector<1x1x16x64xbf16>
    %50 = vector.shape_cast %49 : vector<1x1x16x64xbf16> to vector<16x64xbf16>
    %cst_61 = arith.constant dense<0.000000e+00> : vector<16x64xf32>
    %51 = tpu.matmul %48, %50, %cst_61 {dimension_numbers = #tpu.dot_dimension_numbers<[1], [0], [0], [1], [0, 0, 1, 1], [], []>} : vector<16x16xbf16>, vector<16x64xbf16>, vector<16x64xf32> -> vector<16x64xf32>
    %52 = arith.addf %46, %51 : vector<16x64xf32>
    %c0_62 = arith.constant 0 : index
    %c0_63 = arith.constant 0 : index
    %53 = vector.load %arg4[%c0_62, %c0_63] : memref<16x1xf32, #tpu.memory_space<vmem>>, vector<16x1xf32>
    %54 = vector.broadcast %53 : vector<16x1xf32> to vector<16x64xf32>
    %55 = arith.mulf %52, %54 : vector<16x64xf32>
    %c0_64 = arith.constant 0 : index
    %c0_65 = arith.constant 0 : index
    %56 = vector.load %arg5[%c0_64, %c0_65] : memref<16x1xf32, #tpu.memory_space<vmem>>, vector<16x1xf32>
    %57 = vector.broadcast %56 : vector<16x1xf32> to vector<16x64xf32>
    %58 = arith.addf %55, %57 : vector<16x64xf32>
    %cst_66 = arith.constant 0.00999999977 : f32
    %59 = vector.broadcast %cst_66 : f32 to vector<16x64xf32>
    %60 = arith.mulf %59, %58 : vector<16x64xf32>
    %61 = arith.maximumf %58, %60 : vector<16x64xf32>
    %c0_67 = arith.constant 0 : index
    %c0_68 = arith.constant 0 : index
    %c0_69 = arith.constant 0 : index
    %62 = vector.load %arg6[%c0_67, %c0_68, %c0_69] : memref<1x16x64xf32, #tpu.memory_space<vmem>>, vector<1x16x64xf32>
    %63 = vector.shape_cast %62 : vector<1x16x64xf32> to vector<16x64xf32>
    %64 = vector.shape_cast %61 : vector<16x64xf32> to vector<1x16x64xf32>
    tpu.vector_store %arg6[%c0_67, %c0_68, %c0_69], %64 {strides = array<i32>} : memref<1x16x64xf32, #tpu.memory_space<vmem>>, vector<1x16x64xf32>,
    return
  }
  func.func @transform_0(%arg0: i32, %arg1: i32) -> (i32, i32, i32, i32) {
    %c0_i32 = arith.constant 0 : i32
    %c0_i32_0 = arith.constant 0 : i32
    %c0_i32_1 = arith.constant 0 : i32
    return %c0_i32, %arg0, %c0_i32_0, %arg1 : i32, i32, i32, i32
  }
  func.func @transform_1(%arg0: i32, %arg1: i32) -> (i32, i32, i32) {
    %c0_i32 = arith.constant 0 : i32
    %c0_i32_0 = arith.constant 0 : i32
    %c0_i32_1 = arith.constant 0 : i32
    %c0_i32_2 = arith.constant 0 : i32
    return %c0_i32, %c0_i32_0, %c0_i32_1 : i32, i32, i32
  }
  func.func @transform_2(%arg0: i32, %arg1: i32) -> (i32, i32) {
    %c0_i32 = arith.constant 0 : i32
    %c0_i32_0 = arith.constant 0 : i32
    %c0_i32_1 = arith.constant 0 : i32
    return %c0_i32, %c0_i32_0 : i32, i32
  }
  func.func @transform_3(%arg0: i32, %arg1: i32) -> (i32, i32) {
    %c0_i32 = arith.constant 0 : i32
    %c0_i32_0 = arith.constant 0 : i32
    %c0_i32_1 = arith.constant 0 : i32
    return %c0_i32, %c0_i32_0 : i32, i32
  }
  func.func @transform_4(%arg0: i32, %arg1: i32) -> (i32, i32, i32) {
    %c0_i32 = arith.constant 0 : i32
    %c0_i32_0 = arith.constant 0 : i32
    return %arg0, %c0_i32, %arg1 : i32, i32, i32
  }
}

</mosaic_0001>

<llo_original>
// kernel: conv2x_forward.2
$region0: #{conv2x_forward.2}
  #allocation0 [shape = 'u32[]', space=smem, size = 0x4, offset = 0x4, fixed_abs, tag = 'smem constant byte address 0x4 - core index']
  #allocation1 [shape = 'u32[72,128]{1,0:T(1,128)}', space=vmem, size = 0x9000, scoped, tag = 'internal scratch']
  %s0 = inlined_call_operand.vmem [shape: bf16[9,2,4,64], index: 0, kind: input, shape index: {}]
  %s1 = inlined_call_operand.vmem [shape: bf16[9,8,4], index: 1, kind: input, shape index: {}]
  %s2 = inlined_call_operand.vmem [shape: f32[8,1], index: 2, kind: input, shape index: {}]
  %s3 = inlined_call_operand.vmem [shape: f32[8,1], index: 3, kind: input, shape index: {}]
  %s4 = inlined_call_operand.vmem [shape: bf16[2,8,64], index: 4, kind: output, shape index: {}]
  %s5 = sld [smem:[#allocation0]]
  $region90: #{conv2x_forward.2} parent=0
    _
  %s7 = ssub.s32 1, %s5
  %s8 = scalar_select 0, %s7, %s5
  $region1: #{conv2x_forward.2} parent=0
    #allocation2 [shape = 'u8[18432]{0}', space=vmem, size = 0x4800, scoped, tag = 'input window, operand 0']
    loop: start=0, step=1, limit=4
    $region2: #{conv2x_forward.2} parent=1 // loop_pre_header
      _
    $region3: #{conv2x_forward.2} parent=1 // loop_header
      %s10 = sphi 0, %s14
      %p11 = scmp.ge.s32.totalorder %s10, 4
      %s17 = sphi 0, %s29
      %s18 = sphi 0, %s25
      %s19 = sphi 0, %s17
      %s20 = sphi 0, %s18
      %s21 = sphi 0, %s19
      %s22 = sphi 0, %s20
      %s34 = sphi 0, %s36
      %s37 = sphi 0, %s34
      %s38 = sphi 0, %s37
      %s54 = sphi 0, %s38
      %s58 = sphi 0, %s58
      %s60 = sphi 0, %s58
      %s61 = sphi 0, %s60
      %s75 = sphi 0, %s61
      %s79 = sphi 0, %s79
      %s81 = sphi 0, %s79
      %s82 = sphi 0, %s81
      %s96 = sphi 0, %s82
      %s100 = sphi 0, %s100
      %s102 = sphi 0, %s100
      %s103 = sphi 0, %s102
      %s117 = sphi 0, %s103
      %s125 = sphi 0, %s127
      %s128 = sphi 0, %s125
      %s129 = sphi 0, %s128
      %s145 = sphi 0, %s129
    $region4: #{conv2x_forward.2} parent=1 // loop_header_branch
      %13 = sbr.rel (%p11) target = $region8
    $region5: #{conv2x_forward.2} parent=1 // loop_body
      %s15 = ssub.s32 %s10, 1
      %s16 = ssub.s32 %s10, 2
      %s23 = sadd.s32 1, %s18
      %p24 = scmp.ge.s32.totalorder %s23, 1
      %s25 = scalar_select %p24, 0, %s23
      %s26 = sadd.s32 1, %s17
      %s27 = scalar_select %p24, %s26, %s17
      %p28 = scmp.ge.s32.totalorder %s27, 2
      %s29 = scalar_select %p28, 0, %s27
      %s30 = ssub.s32 %s17, %s29
      %s31 = ssub.s32 %s18, %s25
      %s32 = sor.u32 %s30, %s31
      %p33 = scmp.eq.s32.totalorder %s32, 0
      %s35 = sadd.s32 %s34, 1
      %s36 = scalar_select %p33, %s34, %s35
      %p39 = pneg %p33
      %p40 = scmp.eq.s32.totalorder %s10, 1
      %p41 = por %p39, %p40
      %p42 = scmp.ne.s32.totalorder %s34, %s37
      %p43 = scmp.eq.s32.totalorder %s10, 0
      %p44 = por %p42, %p43
      %p45 = scmp.ne.s32.totalorder %s34, %s37
      %p46 = scmp.eq.s32.totalorder %s15, 1
      %p47 = por %p45, %p46
      %p48 = scmp.ne.s32.totalorder %s37, %s38
      %p49 = scmp.eq.s32.totalorder %s15, 0
      %p50 = por %p48, %p49
      %p51 = scmp.ne.s32.totalorder %s37, %s38
      %p52 = scmp.eq.s32.totalorder %s16, 1
      %p53 = por %p51, %p52
      %p55 = scmp.ne.s32.totalorder %s38, %s54
      %p56 = scmp.eq.s32.totalorder %s16, 0
      %p57 = por %p55, %p56
      %s59 = sadd.s32 %s58, 1
      %p62 = scmp.eq.s32.totalorder %s10, 1
      %p63 = scmp.ne.s32.totalorder %s58, %s60
      %p64 = scmp.eq.s32.totalorder %s10, 0
      %p65 = por %p63, %p64
      %p66 = scmp.ne.s32.totalorder %s58, %s60
      %p67 = scmp.eq.s32.totalorder %s15, 1
      %p68 = por %p66, %p67
      %p69 = scmp.ne.s32.totalorder %s60, %s61
      %p70 = scmp.eq.s32.totalorder %s15, 0
      %p71 = por %p69, %p70
      %p72 = scmp.ne.s32.totalorder %s60, %s61
      %p73 = scmp.eq.s32.totalorder %s16, 1
      %p74 = por %p72, %p73
      %p76 = scmp.ne.s32.totalorder %s61, %s75
      %p77 = scmp.eq.s32.totalorder %s16, 0
      %p78 = por %p76, %p77
      %s80 = sadd.s32 %s79, 1
      %p83 = scmp.eq.s32.totalorder %s10, 1
      %p84 = scmp.ne.s32.totalorder %s79, %s81
      %p85 = scmp.eq.s32.totalorder %s10, 0
      %p86 = por %p84, %p85
      %p87 = scmp.ne.s32.totalorder %s79, %s81
      %p88 = scmp.eq.s32.totalorder %s15, 1
      %p89 = por %p87, %p88
      %p90 = scmp.ne.s32.totalorder %s81, %s82
      %p91 = scmp.eq.s32.totalorder %s15, 0
      %p92 = por %p90, %p91
      %p93 = scmp.ne.s32.totalorder %s81, %s82
      %p94 = scmp.eq.s32.totalorder %s16, 1
      %p95 = por %p93, %p94
      %p97 = scmp.ne.s32.totalorder %s82, %s96
      %p98 = scmp.eq.s32.totalorder %s16, 0
      %p99 = por %p97, %p98
      %s101 = sadd.s32 %s100, 1
      %p104 = scmp.eq.s32.totalorder %s10, 1
      %p105 = scmp.ne.s32.totalorder %s100, %s102
      %p106 = scmp.eq.s32.totalorder %s10, 0
      %p107 = por %p105, %p106
      %p108 = scmp.ne.s32.totalorder %s100, %s102
      %p109 = scmp.eq.s32.totalorder %s15, 1
      %p110 = por %p108, %p109
      %p111 = scmp.ne.s32.totalorder %s102, %s103
      %p112 = scmp.eq.s32.totalorder %s15, 0
      %p113 = por %p111, %p112
      %p114 = scmp.ne.s32.totalorder %s102, %s103
      %p115 = scmp.eq.s32.totalorder %s16, 1
      %p116 = por %p114, %p115
      %p118 = scmp.ne.s32.totalorder %s103, %s117
      %p119 = scmp.eq.s32.totalorder %s16, 0
      %p120 = por %p118, %p119
      %s121 = ssub.s32 %s17, %s29
      %s122 = ssub.s32 %s18, %s25
      %s123 = sor.u32 %s121, %s122
      %p124 = scmp.eq.s32.totalorder %s123, 0
      %s126 = sadd.s32 %s125, 1
      %s127 = scalar_select %p124, %s125, %s126
      %p130 = pneg %p124
      %p131 = scmp.eq.s32.totalorder %s10, 1
      %p132 = por %p130, %p131
      %p133 = scmp.ne.s32.totalorder %s125, %s128
      %p134 = scmp.eq.s32.totalorder %s10, 0
      %p135 = por %p133, %p134
      %p136 = scmp.ne.s32.totalorder %s125, %s128
      %p137 = scmp.eq.s32.totalorder %s15, 1
      %p138 = por %p136, %p137
      %p139 = scmp.ne.s32.totalorder %s128, %s129
      %p140 = scmp.eq.s32.totalorder %s15, 0
      %p141 = por %p139, %p140
      %p142 = scmp.ne.s32.totalorder %s128, %s129
      %p143 = scmp.eq.s32.totalorder %s16, 1
      %p144 = por %p142, %p143
      %p146 = scmp.ne.s32.totalorder %s129, %s145
      %p147 = scmp.eq.s32.totalorder %s16, 0
      %p148 = por %p146, %p147
      %p149 = scmp.le.s32.totalorder 1, %s10
      %p150 = scmp.lt.s32.totalorder %s10, 3
      %p151 = pnand %p149, %p150
      %p152 = pneg %p151
      // Predicated region
      $region9: #{conv2x_forward.2} parent=5 // pred_check
        _
      $region10: #{conv2x_forward.2} parent=5 // pred_check_branch
        %154 = sbr.rel (%p151) target = $region12
      $region11: #{conv2x_forward.2} parent=5 // pred_region
        %s155 = ssub.s32 %s10, 1
        // Predicated region
        $region13: #{conv2x_forward.2} parent=11 // pred_check
          %p156 = pneg %p71
        $region14: #{conv2x_forward.2} parent=11 // pred_check_branch
          %158 = sbr.rel (%p156) target = $region16
        $region15: #{conv2x_forward.2} parent=11 // pred_region
          _
        $region16: #{conv2x_forward.2} parent=11 // pred_fallthru
          _
        // Predicated region
        $region17: #{conv2x_forward.2} parent=11 // pred_check
          %p159 = pneg %p92
        $region18: #{conv2x_forward.2} parent=11 // pred_check_branch
          %161 = sbr.rel (%p159) target = $region20
        $region19: #{conv2x_forward.2} parent=11 // pred_region
          _
        $region20: #{conv2x_forward.2} parent=11 // pred_fallthru
          _
        // Predicated region
        $region21: #{conv2x_forward.2} parent=11 // pred_check
          %p162 = pneg %p113
        $region22: #{conv2x_forward.2} parent=11 // pred_check_branch
          %164 = sbr.rel (%p162) target = $region24
        $region23: #{conv2x_forward.2} parent=11 // pred_region
          _
        $region24: #{conv2x_forward.2} parent=11 // pred_fallthru
          _
      $region12: #{conv2x_forward.2} parent=5 // pred_fallthru
        _
      %p165 = scmp.lt.s32.totalorder %s10, 2
      // Predicated region
      $region25: #{conv2x_forward.2} parent=5 // pred_check
        %p166 = pneg %p165
      $region26: #{conv2x_forward.2} parent=5 // pred_check_branch
        %168 = sbr.rel (%p166) target = $region28
      $region27: #{conv2x_forward.2} parent=5 // pred_region
        // Predicated region
        $region29: #{conv2x_forward.2} parent=27 // pred_check
          %p169 = pneg %p44
        $region30: #{conv2x_forward.2} parent=27 // pred_check_branch
          %171 = sbr.rel (%p169) target = $region32
        $region31: #{conv2x_forward.2} parent=27 // pred_region
          %s172 = sand.u32 %s34, 1
          %s173 = sand.u32 %s34, 1
          %s174 = smul.addr %s173, 18
          %s175 = scalar_lea.vmem [#allocation2], %s174
          %s176 = sadd.s32 %s18, %s17
          %s177 = smul.addr %s176, 2
          %s178 = scalar_lea.vmem %s0, %s177
          // Predicated region
          $region33: #{conv2x_forward.2} parent=31 // pred_check
            _
          $region34: #{conv2x_forward.2} parent=31 // pred_check_branch
            %180 = sbr.rel (0) target = $region36
          $region35: #{conv2x_forward.2} parent=31 // pred_region
            // Predicated region
            $region37: #{conv2x_forward.2} parent=35 // pred_check
              _
            $region38: #{conv2x_forward.2} parent=35 // pred_check_branch
              %182 = sbr.rel target = $region40
            $region39: #{conv2x_forward.2} parent=35 // pred_region
              // Predicated region
              $region52: #{conv2x_forward.2} parent=39 // pred_check
                _
              $region53: #{conv2x_forward.2} parent=39 // pred_check_branch
                %214 = sbr.rel (0) target = $region55
              $region54: #{conv2x_forward.2} parent=39 // pred_region
                loop: start=0, step=1, limit=1
                $region56: #{conv2x_forward.2} parent=54 // loop_pre_header
                  _
                $region57: #{conv2x_forward.2} parent=54 // loop_header
                  %s216 = sphi 0, %s220
                  %p217 = scmp.ge.s32.totalorder %s216, 1
                  %s221 = sphi %s178, %s178
                  %s222 = sphi %s175, %s175
                $region58: #{conv2x_forward.2} parent=54 // loop_header_branch
                  %219 = sbr.rel (%p217) target = $region62
                $region59: #{conv2x_forward.2} parent=54 // loop_body
                  _
                $region60: #{conv2x_forward.2} parent=54 // loop_footer
                  %s220 = sadd.s32 1, %s216
                $region61: #{conv2x_forward.2} parent=54 // loop_footer_branch
                  %215 = sbr.rel target = $region57
                $region62: #{conv2x_forward.2} parent=54 // loop_exit
                  _
                %s224 = ssub.s32 4, 1
                loop: start=0, step=1, limit=1
                $region63: #{conv2x_forward.2} parent=54 // loop_pre_header
                  _
                $region64: #{conv2x_forward.2} parent=54 // loop_header
                  %s226 = sphi 0, %s230
                  %p227 = scmp.ge.s32.totalorder %s226, 1
                  %s231 = sphi %s178, %s178
                  %s232 = sphi %s175, %s175
                $region65: #{conv2x_forward.2} parent=54 // loop_header_branch
                  %229 = sbr.rel (%p227) target = $region69
                $region66: #{conv2x_forward.2} parent=54 // loop_body
                  %v233 = vld [vmem:[%s231] sm:%s224]
                  %234 = vst [vmem:[%s232] sm:%s224] %v233
                  %v235 = vld [vmem:[%s231 + $0x4] sm:%s224]
                  %236 = vst [vmem:[%s232 + $0x2] sm:%s224] %v235
                  %v237 = vld [vmem:[%s231 + $0x8] sm:%s224]
                  %238 = vst [vmem:[%s232 + $0x4] sm:%s224] %v237
                  %v239 = vld [vmem:[%s231 + $0xc] sm:%s224]
                  %240 = vst [vmem:[%s232 + $0x6] sm:%s224] %v239
                  %v241 = vld [vmem:[%s231 + $0x10] sm:%s224]
                  %242 = vst [vmem:[%s232 + $0x8] sm:%s224] %v241
                  %v243 = vld [vmem:[%s231 + $0x14] sm:%s224]
                  %244 = vst [vmem:[%s232 + $0xa] sm:%s224] %v243
                  %v245 = vld [vmem:[%s231 + $0x18] sm:%s224]
                  %246 = vst [vmem:[%s232 + $0xc] sm:%s224] %v245
                  %v247 = vld [vmem:[%s231 + $0x1c] sm:%s224]
                  %248 = vst [vmem:[%s232 + $0xe] sm:%s224] %v247
                  %v249 = vld [vmem:[%s231 + $0x20] sm:%s224]
                  %250 = vst [vmem:[%s232 + $0x10] sm:%s224] %v249
                $region67: #{conv2x_forward.2} parent=54 // loop_footer
                  %s230 = sadd.s32 1, %s226
                $region68: #{conv2x_forward.2} parent=54 // loop_footer_branch
                  %225 = sbr.rel target = $region64
                $region69: #{conv2x_forward.2} parent=54 // loop_exit
                  _
              $region55: #{conv2x_forward.2} parent=39 // pred_fallthru
                _
            $region40: #{conv2x_forward.2} parent=35 // pred_fallthru
              _
            // Predicated region
            $region41: #{conv2x_forward.2} parent=35 // pred_check
              _
            $region42: #{conv2x_forward.2} parent=35 // pred_check_branch
              %184 = sbr.rel (0) target = $region44
            $region43: #{conv2x_forward.2} parent=35 // pred_region
              %s186 = ssub.s32 4, 1
              loop: start=0, step=1, limit=1
              $region45: #{conv2x_forward.2} parent=43 // loop_pre_header
                _
              $region46: #{conv2x_forward.2} parent=43 // loop_header
                %s188 = sphi 0, %s192
                %p189 = scmp.ge.s32.totalorder %s188, 1
                %s193 = sphi %s178, %s178
                %s194 = sphi %s175, %s175
              $region47: #{conv2x_forward.2} parent=43 // loop_header_branch
                %191 = sbr.rel (%p189) target = $region51
              $region48: #{conv2x_forward.2} parent=43 // loop_body
                %v195 = vld [vmem:[%s193] sm:%s186]
                %196 = vst [vmem:[%s194] sm:%s186] %v195
                %v197 = vld [vmem:[%s193 + $0x4] sm:%s186]
                %198 = vst [vmem:[%s194 + $0x2] sm:%s186] %v197
                %v199 = vld [vmem:[%s193 + $0x8] sm:%s186]
                %200 = vst [vmem:[%s194 + $0x4] sm:%s186] %v199
                %v201 = vld [vmem:[%s193 + $0xc] sm:%s186]
                %202 = vst [vmem:[%s194 + $0x6] sm:%s186] %v201
                %v203 = vld [vmem:[%s193 + $0x10] sm:%s186]
                %204 = vst [vmem:[%s194 + $0x8] sm:%s186] %v203
                %v205 = vld [vmem:[%s193 + $0x14] sm:%s186]
                %206 = vst [vmem:[%s194 + $0xa] sm:%s186] %v205
                %v207 = vld [vmem:[%s193 + $0x18] sm:%s186]
                %208 = vst [vmem:[%s194 + $0xc] sm:%s186] %v207
                %v209 = vld [vmem:[%s193 + $0x1c] sm:%s186]
                %210 = vst [vmem:[%s194 + $0xe] sm:%s186] %v209
                %v211 = vld [vmem:[%s193 + $0x20] sm:%s186]
                %212 = vst [vmem:[%s194 + $0x10] sm:%s186] %v211
              $region49: #{conv2x_forward.2} parent=43 // loop_footer
                %s192 = sadd.s32 1, %s188
              $region50: #{conv2x_forward.2} parent=43 // loop_footer_branch
                %187 = sbr.rel target = $region46
              $region51: #{conv2x_forward.2} parent=43 // loop_exit
                _
            $region44: #{conv2x_forward.2} parent=35 // pred_fallthru
              _
          $region36: #{conv2x_forward.2} parent=31 // pred_fallthru
            _
          %251 = vnop
        $region32: #{conv2x_forward.2} parent=27 // pred_fallthru
          _
      $region28: #{conv2x_forward.2} parent=5 // pred_fallthru
        _
      %p252 = scmp.le.s32.totalorder 1, %s10
      %p253 = scmp.lt.s32.totalorder %s10, 3
      %p254 = pnand %p252, %p253
      %p255 = pneg %p254
      // Predicated region
      $region70: #{conv2x_forward.2} parent=5 // pred_check
        _
      $region71: #{conv2x_forward.2} parent=5 // pred_check_branch
        %257 = sbr.rel (%p254) target = $region73
      $region72: #{conv2x_forward.2} parent=5 // pred_region
        %s258 = ssub.s32 %s10, 1
        %s259 = sand.u32 %s37, 1
        %s260 = sand.u32 %s37, 1
        %s261 = smul.addr %s260, 18
        %s262 = scalar_lea.vmem [#allocation2], %s261
        // Predicated region
        $region74: #{conv2x_forward.2} parent=72 // pred_check
          %p263 = pneg %p50
        $region75: #{conv2x_forward.2} parent=72 // pred_check_branch
          %265 = sbr.rel (%p263) target = $region77
        $region76: #{conv2x_forward.2} parent=72 // pred_region
          _
        $region77: #{conv2x_forward.2} parent=72 // pred_fallthru
          _
        %s266 = sand.u32 %s37, 1
        %s267 = sand.u32 %s37, 1
        %s268 = smul.addr %s267, 18
        %s269 = scalar_lea.vmem [#allocation2], %s268
        %p270 = pneg %p50
        %p271 = pneg %p47
        %p272 = pneg %p71
        %p273 = pneg %p68
        %p274 = pneg %p92
        %p275 = pneg %p89
        %p276 = pneg %p113
        %p277 = pneg %p110
        %p278 = pneg %p141
        %p279 = pneg %p138
        %p280 = scmp.lt.s32.totalorder %s19, 1
        %s281 = scalar_select %p280, %s19, 1
        %p282 = scmp.lt.s32.totalorder %s20, 0
        %s283 = scalar_select %p282, %s20, 0
        %s284 = sadd.s32 %s283, %s281
        %s285 = smul.addr %s284, 4
        %s286 = scalar_lea.vmem %s4, %s285
        %p287 = scmp.lt.s32.totalorder %s19, 1
        %s288 = scalar_select %p287, %s19, 1
        %p289 = scmp.lt.s32.totalorder %s20, 0
        %s290 = scalar_select %p289, %s20, 0
        %s291 = sadd.s32 %s290, %s288
        %s292 = smul.addr %s291, 4
        %s293 = scalar_lea.vmem %s4, %s292
        %v295 = vld [vmem:[%s1] sm:$0xf]
        %v296 = vld [vmem:[%s262] sm:$0x3]
        %s297 = scalar_lea.vmem %s1, 4
        %v298 = vld [vmem:[%s297] sm:$0xf]
        %s299 = scalar_lea.vmem %s262, 2 [#allocation2]
        %v300 = vld [vmem:[%s299] sm:$0x3]
        %vm301 = vcmask 31744
        %v303 = vsel %vm301, %v298, 0
        %vm305 = vcmask 1041408
        %v307 = vsel %vm305, %v300, 0
        %309 = vmatpush.bf16.msra.mxu0 0
        %310 = vmatpush.bf16.msra.mxu0 0
        %311 = vmatpush.bf16.msra.mxu0 0
        %312 = vmatpush.bf16.msra.mxu0 0
        %313 = vmatpush.bf16.msra.mxu0 0
        %314 = vmatpush.bf16.msra.mxu0 0
        %315 = vmatpush.bf16.msra.mxu0 0
        %316 = vmatpush.bf16.msra.mxu0 %v307
        %317 = vmatmul.bf16.gmra.mxu0 %v303
        %v318 = vpop.f32.mrf.mxu0
        %v319 = vadd.f32 0.0, %v318
        %v320 = vpop.f32.mrf.mxu0
        %321 = vdwg.mxu0
        %v323 = vsel %vm301, %v295, 0
        %v326 = vsel %vm305, %v296, 0
        %328 = vmatpush.bf16.msra.mxu0 0
        %329 = vmatpush.bf16.msra.mxu0 0
        %330 = vmatpush.bf16.msra.mxu0 0
        %331 = vmatpush.bf16.msra.mxu0 0
        %332 = vmatpush.bf16.msra.mxu0 0
        %333 = vmatpush.bf16.msra.mxu0 0
        %334 = vmatpush.bf16.msra.mxu0 0
        %335 = vmatpush.bf16.msra.mxu0 %v326
        %336 = vmatmul.bf16.gmra.mxu0 %v323
        %v337 = vpop.f32.mrf.mxu0
        %v338 = vadd.f32 %v319, %v337
        %v339 = vpop.f32.mrf.mxu0
        %340 = vdwg.mxu0
        %s341 = scalar_lea.vmem %s1, 8
        %v342 = vld [vmem:[%s341] sm:$0xf]
        %s343 = scalar_lea.vmem %s262, 4 [#allocation2]
        %v344 = vld [vmem:[%s343] sm:$0x3]
        %v346 = vsel %vm301, %v342, 0
        %v349 = vsel %vm305, %v344, 0
        %351 = vmatpush.bf16.msra.mxu0 0
        %352 = vmatpush.bf16.msra.mxu0 0
        %353 = vmatpush.bf16.msra.mxu0 0
        %354 = vmatpush.bf16.msra.mxu0 0
        %355 = vmatpush.bf16.msra.mxu0 0
        %356 = vmatpush.bf16.msra.mxu0 0
        %357 = vmatpush.bf16.msra.mxu0 0
        %358 = vmatpush.bf16.msra.mxu0 %v349
        %359 = vmatmul.bf16.gmra.mxu0 %v346
        %v360 = vpop.f32.mrf.mxu0
        %v361 = vadd.f32 0.0, %v360
        %v362 = vpop.f32.mrf.mxu0
        %363 = vdwg.mxu0
        %v364 = vadd.f32 %v338, %v361
        %s365 = scalar_lea.vmem %s1, 12
        %v366 = vld [vmem:[%s365] sm:$0xf]
        %s367 = scalar_lea.vmem %s262, 6 [#allocation2]
        %v368 = vld [vmem:[%s367] sm:$0x3]
        %v370 = vsel %vm301, %v366, 0
        %v373 = vsel %vm305, %v368, 0
        %375 = vmatpush.bf16.msra.mxu0 0
        %376 = vmatpush.bf16.msra.mxu0 0
        %377 = vmatpush.bf16.msra.mxu0 0
        %378 = vmatpush.bf16.msra.mxu0 0
        %379 = vmatpush.bf16.msra.mxu0 0
        %380 = vmatpush.bf16.msra.mxu0 0
        %381 = vmatpush.bf16.msra.mxu0 0
        %382 = vmatpush.bf16.msra.mxu0 %v373
        %383 = vmatmul.bf16.gmra.mxu0 %v370
        %v384 = vpop.f32.mrf.mxu0
        %v385 = vadd.f32 0.0, %v384
        %v386 = vpop.f32.mrf.mxu0
        %387 = vdwg.mxu0
        %v388 = vadd.f32 %v364, %v385
        %s389 = scalar_lea.vmem %s1, 16
        %v390 = vld [vmem:[%s389] sm:$0xf]
        %s391 = scalar_lea.vmem %s262, 8 [#allocation2]
        %v392 = vld [vmem:[%s391] sm:$0x3]
        %v394 = vsel %vm301, %v390, 0
        %v397 = vsel %vm305, %v392, 0
        %399 = vmatpush.bf16.msra.mxu0 0
        %400 = vmatpush.bf16.msra.mxu0 0
        %401 = vmatpush.bf16.msra.mxu0 0
        %402 = vmatpush.bf16.msra.mxu0 0
        %403 = vmatpush.bf16.msra.mxu0 0
        %404 = vmatpush.bf16.msra.mxu0 0
        %405 = vmatpush.bf16.msra.mxu0 0
        %406 = vmatpush.bf16.msra.mxu0 %v397
        %407 = vmatmul.bf16.gmra.mxu0 %v394
        %v408 = vpop.f32.mrf.mxu0
        %v409 = vadd.f32 0.0, %v408
        %v410 = vpop.f32.mrf.mxu0
        %411 = vdwg.mxu0
        %v412 = vadd.f32 %v388, %v409
        %s413 = scalar_lea.vmem %s1, 20
        %v414 = vld [vmem:[%s413] sm:$0xf]
        %s415 = scalar_lea.vmem %s262, 10 [#allocation2]
        %v416 = vld [vmem:[%s415] sm:$0x3]
        %v418 = vsel %vm301, %v414, 0
        %v421 = vsel %vm305, %v416, 0
        %423 = vmatpush.bf16.msra.mxu0 0
        %424 = vmatpush.bf16.msra.mxu0 0
        %425 = vmatpush.bf16.msra.mxu0 0
        %426 = vmatpush.bf16.msra.mxu0 0
        %427 = vmatpush.bf16.msra.mxu0 0
        %428 = vmatpush.bf16.msra.mxu0 0
        %429 = vmatpush.bf16.msra.mxu0 0
        %430 = vmatpush.bf16.msra.mxu0 %v421
        %431 = vmatmul.bf16.gmra.mxu0 %v418
        %v432 = vpop.f32.mrf.mxu0
        %v433 = vadd.f32 0.0, %v432
        %v434 = vpop.f32.mrf.mxu0
        %435 = vdwg.mxu0
        %v436 = vadd.f32 %v412, %v433
        %s437 = scalar_lea.vmem %s1, 24
        %v438 = vld [vmem:[%s437] sm:$0xf]
        %s439 = scalar_lea.vmem %s262, 12 [#allocation2]
        %v440 = vld [vmem:[%s439] sm:$0x3]
        %v442 = vsel %vm301, %v438, 0
        %v445 = vsel %vm305, %v440, 0
        %447 = vmatpush.bf16.msra.mxu0 0
        %448 = vmatpush.bf16.msra.mxu0 0
        %449 = vmatpush.bf16.msra.mxu0 0
        %450 = vmatpush.bf16.msra.mxu0 0
        %451 = vmatpush.bf16.msra.mxu0 0
        %452 = vmatpush.bf16.msra.mxu0 0
        %453 = vmatpush.bf16.msra.mxu0 0
        %454 = vmatpush.bf16.msra.mxu0 %v445
        %455 = vmatmul.bf16.gmra.mxu0 %v442
        %v456 = vpop.f32.mrf.mxu0
        %v457 = vadd.f32 0.0, %v456
        %v458 = vpop.f32.mrf.mxu0
        %459 = vdwg.mxu0
        %v460 = vadd.f32 %v436, %v457
        %s461 = scalar_lea.vmem %s1, 28
        %v462 = vld [vmem:[%s461] sm:$0xf]
        %s463 = scalar_lea.vmem %s262, 14 [#allocation2]
        %v464 = vld [vmem:[%s463] sm:$0x3]
        %v466 = vsel %vm301, %v462, 0
        %v469 = vsel %vm305, %v464, 0
        %471 = vmatpush.bf16.msra.mxu0 0
        %472 = vmatpush.bf16.msra.mxu0 0
        %473 = vmatpush.bf16.msra.mxu0 0
        %474 = vmatpush.bf16.msra.mxu0 0
        %475 = vmatpush.bf16.msra.mxu0 0
        %476 = vmatpush.bf16.msra.mxu0 0
        %477 = vmatpush.bf16.msra.mxu0 0
        %478 = vmatpush.bf16.msra.mxu0 %v469
        %479 = vmatmul.bf16.gmra.mxu0 %v466
        %v480 = vpop.f32.mrf.mxu0
        %v481 = vadd.f32 0.0, %v480
        %v482 = vpop.f32.mrf.mxu0
        %483 = vdwg.mxu0
        %v484 = vadd.f32 %v460, %v481
        %s485 = scalar_lea.vmem %s1, 32
        %v486 = vld [vmem:[%s485] sm:$0xf]
        %s487 = scalar_lea.vmem %s262, 16 [#allocation2]
        %v488 = vld [vmem:[%s487] sm:$0x3]
        %v490 = vsel %vm301, %v486, 0
        %v493 = vsel %vm305, %v488, 0
        %495 = vmatpush.bf16.msra.mxu0 0
        %496 = vmatpush.bf16.msra.mxu0 0
        %497 = vmatpush.bf16.msra.mxu0 0
        %498 = vmatpush.bf16.msra.mxu0 0
        %499 = vmatpush.bf16.msra.mxu0 0
        %500 = vmatpush.bf16.msra.mxu0 0
        %501 = vmatpush.bf16.msra.mxu0 0
        %502 = vmatpush.bf16.msra.mxu0 %v493
        %503 = vmatmul.bf16.gmra.mxu0 %v490
        %v504 = vpop.f32.mrf.mxu0
        %v505 = vadd.f32 0.0, %v504
        %v506 = vpop.f32.mrf.mxu0
        %507 = vdwg.mxu0
        %v508 = vadd.f32 %v484, %v505
        %v509 = vld [vmem:[%s2] sm:$0xff]
        %511 = vset.pattern.permute.xlu0 0
        %512 = vperm.xlu0 %511, %v509
        %v513 = vpop.permute.xlu0 %512
        %v515 = vmul.f32 %v508, %v513
        %v516 = vld [vmem:[%s3] sm:$0xff]
        %518 = vset.pattern.permute.xlu0 0
        %519 = vperm.xlu0 %518, %v516
        %v520 = vpop.permute.xlu0 %519
        %v522 = vadd.f32 %v515, %v520
        %v523 = vmul.f32 %v522, 0.01
        %v524 = vmax.f32 %v522, %v523
        %v525 = vpack.c.bf16 %v524, %v524
        %vm526 = vcmask 519168
        %527 = vst.msk [vmem:[%s293] sm:$0xf] %vm526, %v525
        %p528 = scmp.lt.s32.totalorder %s19, 1
        %s529 = scalar_select %p528, %s19, 1
        %p530 = scmp.lt.s32.totalorder %s20, 0
        %s531 = scalar_select %p530, %s20, 0
        %s532 = sadd.s32 %s531, %s529
        %s533 = smul.addr %s532, 4
        %s534 = scalar_lea.vmem %s4, %s533
        // Predicated region
        $region78: #{conv2x_forward.2} parent=72 // pred_check
          %p535 = pneg %p138
        $region79: #{conv2x_forward.2} parent=72 // pred_check_branch
          %537 = sbr.rel (%p535) target = $region81
        $region80: #{conv2x_forward.2} parent=72 // pred_region
          _
        $region81: #{conv2x_forward.2} parent=72 // pred_fallthru
          _
      $region73: #{conv2x_forward.2} parent=5 // pred_fallthru
        _
      %p538 = scmp.le.s32.totalorder 2, %s10
      // Predicated region
      $region82: #{conv2x_forward.2} parent=5 // pred_check
        %p539 = pneg %p538
      $region83: #{conv2x_forward.2} parent=5 // pred_check_branch
        %541 = sbr.rel (%p539) target = $region85
      $region84: #{conv2x_forward.2} parent=5 // pred_region
        %s542 = ssub.s32 %s10, 2
        // Predicated region
        $region86: #{conv2x_forward.2} parent=84 // pred_check
          %p543 = pneg %p144
        $region87: #{conv2x_forward.2} parent=84 // pred_check_branch
          %545 = sbr.rel (%p543) target = $region89
        $region88: #{conv2x_forward.2} parent=84 // pred_region
          %p546 = scmp.lt.s32.totalorder %s21, 1
          %s547 = scalar_select %p546, %s21, 1
          %p548 = scmp.lt.s32.totalorder %s22, 0
          %s549 = scalar_select %p548, %s22, 0
          %s550 = sadd.s32 %s549, %s547
          %s551 = smul.addr %s550, 4
          %s552 = scalar_lea.vmem %s4, %s551
        $region89: #{conv2x_forward.2} parent=84 // pred_fallthru
          _
      $region85: #{conv2x_forward.2} parent=5 // pred_fallthru
        _
    $region6: #{conv2x_forward.2} parent=1 // loop_footer
      %s14 = sadd.s32 1, %s10
    $region7: #{conv2x_forward.2} parent=1 // loop_footer_branch
      %9 = sbr.rel target = $region3
    $region8: #{conv2x_forward.2} parent=1 // loop_exit
      _

// kernel: conv2x_forward.3
$region0: #{conv2x_forward.3}
  #allocation0 [shape = 'u32[]', space=smem, size = 0x4, offset = 0x4, fixed_abs, tag = 'smem constant byte address 0x4 - core index']
  #allocation1 [shape = 'u32[72,128]{1,0:T(1,128)}', space=vmem, size = 0x9000, scoped, tag = 'internal scratch']
  %s0 = inlined_call_operand.vmem [shape: bf16[9,2,16,64], index: 0, kind: input, shape index: {}]
  %s1 = inlined_call_operand.vmem [shape: bf16[9,16,16], index: 1, kind: input, shape index: {}]
  %s2 = inlined_call_operand.vmem [shape: f32[16,1], index: 2, kind: input, shape index: {}]
  %s3 = inlined_call_operand.vmem [shape: f32[16,1], index: 3, kind: input, shape index: {}]
  %s4 = inlined_call_operand.vmem [shape: f32[2,16,64], index: 4, kind: output, shape index: {}]
  %s5 = sld [smem:[#allocation0]]
  $region90: #{conv2x_forward.3} parent=0
    _
  %s7 = ssub.s32 1, %s5
  %s8 = scalar_select 0, %s7, %s5
  $region1: #{conv2x_forward.3} parent=0
    #allocation2 [shape = 'u8[73728]{0}', space=vmem, size = 0x12000, scoped, tag = 'input window, operand 0']
    loop: start=0, step=1, limit=4
    $region2: #{conv2x_forward.3} parent=1 // loop_pre_header
      _
    $region3: #{conv2x_forward.3} parent=1 // loop_header
      %s10 = sphi 0, %s14
      %p11 = scmp.ge.s32.totalorder %s10, 4
      %s17 = sphi 0, %s29
      %s18 = sphi 0, %s25
      %s19 = sphi 0, %s17
      %s20 = sphi 0, %s18
      %s21 = sphi 0, %s19
      %s22 = sphi 0, %s20
      %s34 = sphi 0, %s36
      %s37 = sphi 0, %s34
      %s38 = sphi 0, %s37
      %s54 = sphi 0, %s38
      %s58 = sphi 0, %s58
      %s60 = sphi 0, %s58
      %s61 = sphi 0, %s60
      %s75 = sphi 0, %s61
      %s79 = sphi 0, %s79
      %s81 = sphi 0, %s79
      %s82 = sphi 0, %s81
      %s96 = sphi 0, %s82
      %s100 = sphi 0, %s100
      %s102 = sphi 0, %s100
      %s103 = sphi 0, %s102
      %s117 = sphi 0, %s103
      %s125 = sphi 0, %s127
      %s128 = sphi 0, %s125
      %s129 = sphi 0, %s128
      %s145 = sphi 0, %s129
    $region4: #{conv2x_forward.3} parent=1 // loop_header_branch
      %13 = sbr.rel (%p11) target = $region8
    $region5: #{conv2x_forward.3} parent=1 // loop_body
      %s15 = ssub.s32 %s10, 1
      %s16 = ssub.s32 %s10, 2
      %s23 = sadd.s32 1, %s18
      %p24 = scmp.ge.s32.totalorder %s23, 1
      %s25 = scalar_select %p24, 0, %s23
      %s26 = sadd.s32 1, %s17
      %s27 = scalar_select %p24, %s26, %s17
      %p28 = scmp.ge.s32.totalorder %s27, 2
      %s29 = scalar_select %p28, 0, %s27
      %s30 = ssub.s32 %s17, %s29
      %s31 = ssub.s32 %s18, %s25
      %s32 = sor.u32 %s30, %s31
      %p33 = scmp.eq.s32.totalorder %s32, 0
      %s35 = sadd.s32 %s34, 1
      %s36 = scalar_select %p33, %s34, %s35
      %p39 = pneg %p33
      %p40 = scmp.eq.s32.totalorder %s10, 1
      %p41 = por %p39, %p40
      %p42 = scmp.ne.s32.totalorder %s34, %s37
      %p43 = scmp.eq.s32.totalorder %s10, 0
      %p44 = por %p42, %p43
      %p45 = scmp.ne.s32.totalorder %s34, %s37
      %p46 = scmp.eq.s32.totalorder %s15, 1
      %p47 = por %p45, %p46
      %p48 = scmp.ne.s32.totalorder %s37, %s38
      %p49 = scmp.eq.s32.totalorder %s15, 0
      %p50 = por %p48, %p49
      %p51 = scmp.ne.s32.totalorder %s37, %s38
      %p52 = scmp.eq.s32.totalorder %s16, 1
      %p53 = por %p51, %p52
      %p55 = scmp.ne.s32.totalorder %s38, %s54
      %p56 = scmp.eq.s32.totalorder %s16, 0
      %p57 = por %p55, %p56
      %s59 = sadd.s32 %s58, 1
      %p62 = scmp.eq.s32.totalorder %s10, 1
      %p63 = scmp.ne.s32.totalorder %s58, %s60
      %p64 = scmp.eq.s32.totalorder %s10, 0
      %p65 = por %p63, %p64
      %p66 = scmp.ne.s32.totalorder %s58, %s60
      %p67 = scmp.eq.s32.totalorder %s15, 1
      %p68 = por %p66, %p67
      %p69 = scmp.ne.s32.totalorder %s60, %s61
      %p70 = scmp.eq.s32.totalorder %s15, 0
      %p71 = por %p69, %p70
      %p72 = scmp.ne.s32.totalorder %s60, %s61
      %p73 = scmp.eq.s32.totalorder %s16, 1
      %p74 = por %p72, %p73
      %p76 = scmp.ne.s32.totalorder %s61, %s75
      %p77 = scmp.eq.s32.totalorder %s16, 0
      %p78 = por %p76, %p77
      %s80 = sadd.s32 %s79, 1
      %p83 = scmp.eq.s32.totalorder %s10, 1
      %p84 = scmp.ne.s32.totalorder %s79, %s81
      %p85 = scmp.eq.s32.totalorder %s10, 0
      %p86 = por %p84, %p85
      %p87 = scmp.ne.s32.totalorder %s79, %s81
      %p88 = scmp.eq.s32.totalorder %s15, 1
      %p89 = por %p87, %p88
      %p90 = scmp.ne.s32.totalorder %s81, %s82
      %p91 = scmp.eq.s32.totalorder %s15, 0
      %p92 = por %p90, %p91
      %p93 = scmp.ne.s32.totalorder %s81, %s82
      %p94 = scmp.eq.s32.totalorder %s16, 1
      %p95 = por %p93, %p94
      %p97 = scmp.ne.s32.totalorder %s82, %s96
      %p98 = scmp.eq.s32.totalorder %s16, 0
      %p99 = por %p97, %p98
      %s101 = sadd.s32 %s100, 1
      %p104 = scmp.eq.s32.totalorder %s10, 1
      %p105 = scmp.ne.s32.totalorder %s100, %s102
      %p106 = scmp.eq.s32.totalorder %s10, 0
      %p107 = por %p105, %p106
      %p108 = scmp.ne.s32.totalorder %s100, %s102
      %p109 = scmp.eq.s32.totalorder %s15, 1
      %p110 = por %p108, %p109
      %p111 = scmp.ne.s32.totalorder %s102, %s103
      %p112 = scmp.eq.s32.totalorder %s15, 0
      %p113 = por %p111, %p112
      %p114 = scmp.ne.s32.totalorder %s102, %s103
      %p115 = scmp.eq.s32.totalorder %s16, 1
      %p116 = por %p114, %p115
      %p118 = scmp.ne.s32.totalorder %s103, %s117
      %p119 = scmp.eq.s32.totalorder %s16, 0
      %p120 = por %p118, %p119
      %s121 = ssub.s32 %s17, %s29
      %s122 = ssub.s32 %s18, %s25
      %s123 = sor.u32 %s121, %s122
      %p124 = scmp.eq.s32.totalorder %s123, 0
      %s126 = sadd.s32 %s125, 1
      %s127 = scalar_select %p124, %s125, %s126
      %p130 = pneg %p124
      %p131 = scmp.eq.s32.totalorder %s10, 1
      %p132 = por %p130, %p131
      %p133 = scmp.ne.s32.totalorder %s125, %s128
      %p134 = scmp.eq.s32.totalorder %s10, 0
      %p135 = por %p133, %p134
      %p136 = scmp.ne.s32.totalorder %s125, %s128
      %p137 = scmp.eq.s32.totalorder %s15, 1
      %p138 = por %p136, %p137
      %p139 = scmp.ne.s32.totalorder %s128, %s129
      %p140 = scmp.eq.s32.totalorder %s15, 0
      %p141 = por %p139, %p140
      %p142 = scmp.ne.s32.totalorder %s128, %s129
      %p143 = scmp.eq.s32.totalorder %s16, 1
      %p144 = por %p142, %p143
      %p146 = scmp.ne.s32.totalorder %s129, %s145
      %p147 = scmp.eq.s32.totalorder %s16, 0
      %p148 = por %p146, %p147
      %p149 = scmp.le.s32.totalorder 1, %s10
      %p150 = scmp.lt.s32.totalorder %s10, 3
      %p151 = pnand %p149, %p150
      %p152 = pneg %p151
      // Predicated region
      $region9: #{conv2x_forward.3} parent=5 // pred_check
        _
      $region10: #{conv2x_forward.3} parent=5 // pred_check_branch
        %154 = sbr.rel (%p151) target = $region12
      $region11: #{conv2x_forward.3} parent=5 // pred_region
        %s155 = ssub.s32 %s10, 1
        // Predicated region
        $region13: #{conv2x_forward.3} parent=11 // pred_check
          %p156 = pneg %p71
        $region14: #{conv2x_forward.3} parent=11 // pred_check_branch
          %158 = sbr.rel (%p156) target = $region16
        $region15: #{conv2x_forward.3} parent=11 // pred_region
          _
        $region16: #{conv2x_forward.3} parent=11 // pred_fallthru
          _
        // Predicated region
        $region17: #{conv2x_forward.3} parent=11 // pred_check
          %p159 = pneg %p92
        $region18: #{conv2x_forward.3} parent=11 // pred_check_branch
          %161 = sbr.rel (%p159) target = $region20
        $region19: #{conv2x_forward.3} parent=11 // pred_region
          _
        $region20: #{conv2x_forward.3} parent=11 // pred_fallthru
          _
        // Predicated region
        $region21: #{conv2x_forward.3} parent=11 // pred_check
          %p162 = pneg %p113
        $region22: #{conv2x_forward.3} parent=11 // pred_check_branch
          %164 = sbr.rel (%p162) target = $region24
        $region23: #{conv2x_forward.3} parent=11 // pred_region
          _
        $region24: #{conv2x_forward.3} parent=11 // pred_fallthru
          _
      $region12: #{conv2x_forward.3} parent=5 // pred_fallthru
        _
      %p165 = scmp.lt.s32.totalorder %s10, 2
      // Predicated region
      $region25: #{conv2x_forward.3} parent=5 // pred_check
        %p166 = pneg %p165
      $region26: #{conv2x_forward.3} parent=5 // pred_check_branch
        %168 = sbr.rel (%p166) target = $region28
      $region27: #{conv2x_forward.3} parent=5 // pred_region
        // Predicated region
        $region29: #{conv2x_forward.3} parent=27 // pred_check
          %p169 = pneg %p44
        $region30: #{conv2x_forward.3} parent=27 // pred_check_branch
          %171 = sbr.rel (%p169) target = $region32
        $region31: #{conv2x_forward.3} parent=27 // pred_region
          %s172 = sand.u32 %s34, 1
          %s173 = sand.u32 %s34, 1
          %s174 = smul.addr %s173, 72
          %s175 = scalar_lea.vmem [#allocation2], %s174
          %s176 = smul.addr %s17, 2
          %s177 = sadd.s32 %s18, %s176
          %s178 = smul.addr %s177, 4
          %s179 = scalar_lea.vmem %s0, %s178
          // Predicated region
          $region33: #{conv2x_forward.3} parent=31 // pred_check
            _
          $region34: #{conv2x_forward.3} parent=31 // pred_check_branch
            %181 = sbr.rel (0) target = $region36
          $region35: #{conv2x_forward.3} parent=31 // pred_region
            // Predicated region
            $region37: #{conv2x_forward.3} parent=35 // pred_check
              _
            $region38: #{conv2x_forward.3} parent=35 // pred_check_branch
              %183 = sbr.rel target = $region40
            $region39: #{conv2x_forward.3} parent=35 // pred_region
              // Predicated region
              $region52: #{conv2x_forward.3} parent=39 // pred_check
                _
              $region53: #{conv2x_forward.3} parent=39 // pred_check_branch
                %233 = sbr.rel (0) target = $region55
              $region54: #{conv2x_forward.3} parent=39 // pred_region
                loop: start=0, step=1, limit=1
                $region56: #{conv2x_forward.3} parent=54 // loop_pre_header
                  _
                $region57: #{conv2x_forward.3} parent=54 // loop_header
                  %s235 = sphi 0, %s239
                  %p236 = scmp.ge.s32.totalorder %s235, 1
                  %s240 = sphi %s179, %s179
                  %s241 = sphi %s175, %s175
                $region58: #{conv2x_forward.3} parent=54 // loop_header_branch
                  %238 = sbr.rel (%p236) target = $region62
                $region59: #{conv2x_forward.3} parent=54 // loop_body
                  _
                $region60: #{conv2x_forward.3} parent=54 // loop_footer
                  %s239 = sadd.s32 1, %s235
                $region61: #{conv2x_forward.3} parent=54 // loop_footer_branch
                  %234 = sbr.rel target = $region57
                $region62: #{conv2x_forward.3} parent=54 // loop_exit
                  _
                %s243 = ssub.s32 16, 1
                loop: start=0, step=1, limit=1
                $region63: #{conv2x_forward.3} parent=54 // loop_pre_header
                  _
                $region64: #{conv2x_forward.3} parent=54 // loop_header
                  %s245 = sphi 0, %s249
                  %p246 = scmp.ge.s32.totalorder %s245, 1
                  %s250 = sphi %s179, %s179
                  %s251 = sphi %s175, %s175
                $region65: #{conv2x_forward.3} parent=54 // loop_header_branch
                  %248 = sbr.rel (%p246) target = $region69
                $region66: #{conv2x_forward.3} parent=54 // loop_body
                  %v252 = vld [vmem:[%s250] sm:%s243]
                  %253 = vst [vmem:[%s251] sm:%s243] %v252
                  %v254 = vld [vmem:[%s250 + $0x4] sm:%s243]
                  %255 = vst [vmem:[%s251 + $0x4] sm:%s243] %v254
                  %v256 = vld [vmem:[%s250 + $0x10] sm:%s243]
                  %257 = vst [vmem:[%s251 + $0x8] sm:%s243] %v256
                  %v258 = vld [vmem:[%s250 + $0x14] sm:%s243]
                  %259 = vst [vmem:[%s251 + $0xc] sm:%s243] %v258
                  %v260 = vld [vmem:[%s250 + $0x20] sm:%s243]
                  %261 = vst [vmem:[%s251 + $0x10] sm:%s243] %v260
                  %v262 = vld [vmem:[%s250 + $0x24] sm:%s243]
                  %263 = vst [vmem:[%s251 + $0x14] sm:%s243] %v262
                  %v264 = vld [vmem:[%s250 + $0x30] sm:%s243]
                  %265 = vst [vmem:[%s251 + $0x18] sm:%s243] %v264
                  %v266 = vld [vmem:[%s250 + $0x34] sm:%s243]
                  %267 = vst [vmem:[%s251 + $0x1c] sm:%s243] %v266
                  %v268 = vld [vmem:[%s250 + $0x40] sm:%s243]
                  %269 = vst [vmem:[%s251 + $0x20] sm:%s243] %v268
                  %v270 = vld [vmem:[%s250 + $0x44] sm:%s243]
                  %271 = vst [vmem:[%s251 + $0x24] sm:%s243] %v270
                  %v272 = vld [vmem:[%s250 + $0x50] sm:%s243]
                  %273 = vst [vmem:[%s251 + $0x28] sm:%s243] %v272
                  %v274 = vld [vmem:[%s250 + $0x54] sm:%s243]
                  %275 = vst [vmem:[%s251 + $0x2c] sm:%s243] %v274
                  %v276 = vld [vmem:[%s250 + $0x60] sm:%s243]
                  %277 = vst [vmem:[%s251 + $0x30] sm:%s243] %v276
                  %v278 = vld [vmem:[%s250 + $0x64] sm:%s243]
                  %279 = vst [vmem:[%s251 + $0x34] sm:%s243] %v278
                  %v280 = vld [vmem:[%s250 + $0x70] sm:%s243]
                  %281 = vst [vmem:[%s251 + $0x38] sm:%s243] %v280
                  %v282 = vld [vmem:[%s250 + $0x74] sm:%s243]
                  %283 = vst [vmem:[%s251 + $0x3c] sm:%s243] %v282
                  %v284 = vld [vmem:[%s250 + $0x80] sm:%s243]
                  %285 = vst [vmem:[%s251 + $0x40] sm:%s243] %v284
                  %v286 = vld [vmem:[%s250 + $0x84] sm:%s243]
                  %287 = vst [vmem:[%s251 + $0x44] sm:%s243] %v286
                $region67: #{conv2x_forward.3} parent=54 // loop_footer
                  %s249 = sadd.s32 1, %s245
                $region68: #{conv2x_forward.3} parent=54 // loop_footer_branch
                  %244 = sbr.rel target = $region64
                $region69: #{conv2x_forward.3} parent=54 // loop_exit
                  _
              $region55: #{conv2x_forward.3} parent=39 // pred_fallthru
                _
            $region40: #{conv2x_forward.3} parent=35 // pred_fallthru
              _
            // Predicated region
            $region41: #{conv2x_forward.3} parent=35 // pred_check
              _
            $region42: #{conv2x_forward.3} parent=35 // pred_check_branch
              %185 = sbr.rel (0) target = $region44
            $region43: #{conv2x_forward.3} parent=35 // pred_region
              %s187 = ssub.s32 16, 1
              loop: start=0, step=1, limit=1
              $region45: #{conv2x_forward.3} parent=43 // loop_pre_header
                _
              $region46: #{conv2x_forward.3} parent=43 // loop_header
                %s189 = sphi 0, %s193
                %p190 = scmp.ge.s32.totalorder %s189, 1
                %s194 = sphi %s179, %s179
                %s195 = sphi %s175, %s175
              $region47: #{conv2x_forward.3} parent=43 // loop_header_branch
                %192 = sbr.rel (%p190) target = $region51
              $region48: #{conv2x_forward.3} parent=43 // loop_body
                %v196 = vld [vmem:[%s194] sm:%s187]
                %197 = vst [vmem:[%s195] sm:%s187] %v196
                %v198 = vld [vmem:[%s194 + $0x4] sm:%s187]
                %199 = vst [vmem:[%s195 + $0x4] sm:%s187] %v198
                %v200 = vld [vmem:[%s194 + $0x10] sm:%s187]
                %201 = vst [vmem:[%s195 + $0x8] sm:%s187] %v200
                %v202 = vld [vmem:[%s194 + $0x14] sm:%s187]
                %203 = vst [vmem:[%s195 + $0xc] sm:%s187] %v202
                %v204 = vld [vmem:[%s194 + $0x20] sm:%s187]
                %205 = vst [vmem:[%s195 + $0x10] sm:%s187] %v204
                %v206 = vld [vmem:[%s194 + $0x24] sm:%s187]
                %207 = vst [vmem:[%s195 + $0x14] sm:%s187] %v206
                %v208 = vld [vmem:[%s194 + $0x30] sm:%s187]
                %209 = vst [vmem:[%s195 + $0x18] sm:%s187] %v208
                %v210 = vld [vmem:[%s194 + $0x34] sm:%s187]
                %211 = vst [vmem:[%s195 + $0x1c] sm:%s187] %v210
                %v212 = vld [vmem:[%s194 + $0x40] sm:%s187]
                %213 = vst [vmem:[%s195 + $0x20] sm:%s187] %v212
                %v214 = vld [vmem:[%s194 + $0x44] sm:%s187]
                %215 = vst [vmem:[%s195 + $0x24] sm:%s187] %v214
                %v216 = vld [vmem:[%s194 + $0x50] sm:%s187]
                %217 = vst [vmem:[%s195 + $0x28] sm:%s187] %v216
                %v218 = vld [vmem:[%s194 + $0x54] sm:%s187]
                %219 = vst [vmem:[%s195 + $0x2c] sm:%s187] %v218
                %v220 = vld [vmem:[%s194 + $0x60] sm:%s187]
                %221 = vst [vmem:[%s195 + $0x30] sm:%s187] %v220
                %v222 = vld [vmem:[%s194 + $0x64] sm:%s187]
                %223 = vst [vmem:[%s195 + $0x34] sm:%s187] %v222
                %v224 = vld [vmem:[%s194 + $0x70] sm:%s187]
                %225 = vst [vmem:[%s195 + $0x38] sm:%s187] %v224
                %v226 = vld [vmem:[%s194 + $0x74] sm:%s187]
                %227 = vst [vmem:[%s195 + $0x3c] sm:%s187] %v226
                %v228 = vld [vmem:[%s194 + $0x80] sm:%s187]
                %229 = vst [vmem:[%s195 + $0x40] sm:%s187] %v228
                %v230 = vld [vmem:[%s194 + $0x84] sm:%s187]
                %231 = vst [vmem:[%s195 + $0x44] sm:%s187] %v230
              $region49: #{conv2x_forward.3} parent=43 // loop_footer
                %s193 = sadd.s32 1, %s189
              $region50: #{conv2x_forward.3} parent=43 // loop_footer_branch
                %188 = sbr.rel target = $region46
              $region51: #{conv2x_forward.3} parent=43 // loop_exit
                _
            $region44: #{conv2x_forward.3} parent=35 // pred_fallthru
              _
          $region36: #{conv2x_forward.3} parent=31 // pred_fallthru
            _
          %288 = vnop
        $region32: #{conv2x_forward.3} parent=27 // pred_fallthru
          _
      $region28: #{conv2x_forward.3} parent=5 // pred_fallthru
        _
      %p289 = scmp.le.s32.totalorder 1, %s10
      %p290 = scmp.lt.s32.totalorder %s10, 3
      %p291 = pnand %p289, %p290
      %p292 = pneg %p291
      // Predicated region
      $region70: #{conv2x_forward.3} parent=5 // pred_check
        _
      $region71: #{conv2x_forward.3} parent=5 // pred_check_branch
        %294 = sbr.rel (%p291) target = $region73
      $region72: #{conv2x_forward.3} parent=5 // pred_region
        %s295 = ssub.s32 %s10, 1
        %s296 = sand.u32 %s37, 1
        %s297 = sand.u32 %s37, 1
        %s298 = smul.addr %s297, 72
        %s299 = scalar_lea.vmem [#allocation2], %s298
        // Predicated region
        $region74: #{conv2x_forward.3} parent=72 // pred_check
          %p300 = pneg %p50
        $region75: #{conv2x_forward.3} parent=72 // pred_check_branch
          %302 = sbr.rel (%p300) target = $region77
        $region76: #{conv2x_forward.3} parent=72 // pred_region
          _
        $region77: #{conv2x_forward.3} parent=72 // pred_fallthru
          _
        %s303 = sand.u32 %s37, 1
        %s304 = sand.u32 %s37, 1
        %s305 = smul.addr %s304, 72
        %s306 = scalar_lea.vmem [#allocation2], %s305
        %p307 = pneg %p50
        %p308 = pneg %p47
        %p309 = pneg %p71
        %p310 = pneg %p68
        %p311 = pneg %p92
        %p312 = pneg %p89
        %p313 = pneg %p113
        %p314 = pneg %p110
        %p315 = pneg %p141
        %p316 = pneg %p138
        %p317 = scmp.lt.s32.totalorder %s19, 1
        %s318 = scalar_select %p317, %s19, 1
        %p319 = scmp.lt.s32.totalorder %s20, 0
        %s320 = scalar_select %p319, %s20, 0
        %s321 = smul.addr %s318, 2
        %s322 = sadd.s32 %s320, %s321
        %s323 = smul.addr %s322, 8
        %s324 = scalar_lea.vmem %s4, %s323
        %p325 = scmp.lt.s32.totalorder %s19, 1
        %s326 = scalar_select %p325, %s19, 1
        %p327 = scmp.lt.s32.totalorder %s20, 0
        %s328 = scalar_select %p327, %s20, 0
        %s329 = smul.addr %s326, 2
        %s330 = sadd.s32 %s328, %s329
        %s331 = smul.addr %s330, 8
        %s332 = scalar_lea.vmem %s4, %s331
        %v334 = vld [vmem:[%s1] sm:$0xf]
        %v335 = vld [vmem:[%s1 + $0x4] sm:$0xf]
        %v336 = vld [vmem:[%s299] sm:$0xf]
        %v337 = vld [vmem:[%s299 + $0x4] sm:$0xf]
        %s338 = scalar_lea.vmem %s1, 8
        %v339 = vld [vmem:[%s338] sm:$0xf]
        %v340 = vld [vmem:[%s338 + $0x4] sm:$0xf]
        %s341 = scalar_lea.vmem %s299, 8 [#allocation2]
        %v342 = vld [vmem:[%s341] sm:$0xf]
        %v343 = vld [vmem:[%s341 + $0x4] sm:$0xf]
        %v346 = vunpack.c.l.b16 %v339
        %v347 = vunpack.c.l.b16 %v340
        %v348 = vpack.c.b16 %v347, %v346
        %v351 = vunpack.c.l.b16 %v342
        %v352 = vunpack.c.l.b16 %v343
        %v353 = vpack.c.b16 %v352, %v351
        %vm355 = vcmask 130048
        %v357 = vsel %vm355, %v348, 0
        %359 = vmatpush.bf16.msra.mxu0 0
        %360 = vmatpush.bf16.msra.mxu0 0
        %361 = vmatpush.bf16.msra.mxu0 0
        %362 = vmatpush.bf16.msra.mxu0 0
        %363 = vmatpush.bf16.msra.mxu0 0
        %364 = vmatpush.bf16.msra.mxu0 0
        %365 = vmatpush.bf16.msra.mxu0 0
        %366 = vmatpush.bf16.msra.mxu0 %v353
        %367 = vmatmul.bf16.gmra.mxu0 %v357
        %v368 = vpop.f32.mrf.mxu0
        %v369 = vadd.f32 0.0, %v368
        %v370 = vpop.f32.mrf.mxu0
        %v371 = vadd.f32 0.0, %v370
        %372 = vdwg.mxu0
        %v375 = vunpack.c.l.b16 %v334
        %v376 = vunpack.c.l.b16 %v335
        %v377 = vpack.c.b16 %v376, %v375
        %v380 = vunpack.c.l.b16 %v336
        %v381 = vunpack.c.l.b16 %v337
        %v382 = vpack.c.b16 %v381, %v380
        %v385 = vsel %vm355, %v377, 0
        %387 = vmatpush.bf16.msra.mxu0 0
        %388 = vmatpush.bf16.msra.mxu0 0
        %389 = vmatpush.bf16.msra.mxu0 0
        %390 = vmatpush.bf16.msra.mxu0 0
        %391 = vmatpush.bf16.msra.mxu0 0
        %392 = vmatpush.bf16.msra.mxu0 0
        %393 = vmatpush.bf16.msra.mxu0 0
        %394 = vmatpush.bf16.msra.mxu0 %v382
        %395 = vmatmul.bf16.gmra.mxu0 %v385
        %v396 = vpop.f32.mrf.mxu0
        %v397 = vadd.f32 %v369, %v396
        %v398 = vpop.f32.mrf.mxu0
        %v399 = vadd.f32 %v371, %v398
        %400 = vdwg.mxu0
        %s401 = scalar_lea.vmem %s1, 16
        %v402 = vld [vmem:[%s401] sm:$0xf]
        %v403 = vld [vmem:[%s401 + $0x4] sm:$0xf]
        %s404 = scalar_lea.vmem %s299, 16 [#allocation2]
        %v405 = vld [vmem:[%s404] sm:$0xf]
        %v406 = vld [vmem:[%s404 + $0x4] sm:$0xf]
        %v409 = vunpack.c.l.b16 %v402
        %v410 = vunpack.c.l.b16 %v403
        %v411 = vpack.c.b16 %v410, %v409
        %v414 = vunpack.c.l.b16 %v405
        %v415 = vunpack.c.l.b16 %v406
        %v416 = vpack.c.b16 %v415, %v414
        %v419 = vsel %vm355, %v411, 0
        %421 = vmatpush.bf16.msra.mxu0 0
        %422 = vmatpush.bf16.msra.mxu0 0
        %423 = vmatpush.bf16.msra.mxu0 0
        %424 = vmatpush.bf16.msra.mxu0 0
        %425 = vmatpush.bf16.msra.mxu0 0
        %426 = vmatpush.bf16.msra.mxu0 0
        %427 = vmatpush.bf16.msra.mxu0 0
        %428 = vmatpush.bf16.msra.mxu0 %v416
        %429 = vmatmul.bf16.gmra.mxu0 %v419
        %v430 = vpop.f32.mrf.mxu0
        %v431 = vadd.f32 0.0, %v430
        %v432 = vpop.f32.mrf.mxu0
        %v433 = vadd.f32 0.0, %v432
        %434 = vdwg.mxu0
        %v435 = vadd.f32 %v397, %v431
        %v436 = vadd.f32 %v399, %v433
        %s437 = scalar_lea.vmem %s1, 24
        %v438 = vld [vmem:[%s437] sm:$0xf]
        %v439 = vld [vmem:[%s437 + $0x4] sm:$0xf]
        %s440 = scalar_lea.vmem %s299, 24 [#allocation2]
        %v441 = vld [vmem:[%s440] sm:$0xf]
        %v442 = vld [vmem:[%s440 + $0x4] sm:$0xf]
        %v445 = vunpack.c.l.b16 %v438
        %v446 = vunpack.c.l.b16 %v439
        %v447 = vpack.c.b16 %v446, %v445
        %v450 = vunpack.c.l.b16 %v441
        %v451 = vunpack.c.l.b16 %v442
        %v452 = vpack.c.b16 %v451, %v450
        %v455 = vsel %vm355, %v447, 0
        %457 = vmatpush.bf16.msra.mxu0 0
        %458 = vmatpush.bf16.msra.mxu0 0
        %459 = vmatpush.bf16.msra.mxu0 0
        %460 = vmatpush.bf16.msra.mxu0 0
        %461 = vmatpush.bf16.msra.mxu0 0
        %462 = vmatpush.bf16.msra.mxu0 0
        %463 = vmatpush.bf16.msra.mxu0 0
        %464 = vmatpush.bf16.msra.mxu0 %v452
        %465 = vmatmul.bf16.gmra.mxu0 %v455
        %v466 = vpop.f32.mrf.mxu0
        %v467 = vadd.f32 0.0, %v466
        %v468 = vpop.f32.mrf.mxu0
        %v469 = vadd.f32 0.0, %v468
        %470 = vdwg.mxu0
        %v471 = vadd.f32 %v435, %v467
        %v472 = vadd.f32 %v436, %v469
        %s473 = scalar_lea.vmem %s1, 32
        %v474 = vld [vmem:[%s473] sm:$0xf]
        %v475 = vld [vmem:[%s473 + $0x4] sm:$0xf]
        %s476 = scalar_lea.vmem %s299, 32 [#allocation2]
        %v477 = vld [vmem:[%s476] sm:$0xf]
        %v478 = vld [vmem:[%s476 + $0x4] sm:$0xf]
        %v481 = vunpack.c.l.b16 %v474
        %v482 = vunpack.c.l.b16 %v475
        %v483 = vpack.c.b16 %v482, %v481
        %v486 = vunpack.c.l.b16 %v477
        %v487 = vunpack.c.l.b16 %v478
        %v488 = vpack.c.b16 %v487, %v486
        %v491 = vsel %vm355, %v483, 0
        %493 = vmatpush.bf16.msra.mxu0 0
        %494 = vmatpush.bf16.msra.mxu0 0
        %495 = vmatpush.bf16.msra.mxu0 0
        %496 = vmatpush.bf16.msra.mxu0 0
        %497 = vmatpush.bf16.msra.mxu0 0
        %498 = vmatpush.bf16.msra.mxu0 0
        %499 = vmatpush.bf16.msra.mxu0 0
        %500 = vmatpush.bf16.msra.mxu0 %v488
        %501 = vmatmul.bf16.gmra.mxu0 %v491
        %v502 = vpop.f32.mrf.mxu0
        %v503 = vadd.f32 0.0, %v502
        %v504 = vpop.f32.mrf.mxu0
        %v505 = vadd.f32 0.0, %v504
        %506 = vdwg.mxu0
        %v507 = vadd.f32 %v471, %v503
        %v508 = vadd.f32 %v472, %v505
        %s509 = scalar_lea.vmem %s1, 40
        %v510 = vld [vmem:[%s509] sm:$0xf]
        %v511 = vld [vmem:[%s509 + $0x4] sm:$0xf]
        %s512 = scalar_lea.vmem %s299, 40 [#allocation2]
        %v513 = vld [vmem:[%s512] sm:$0xf]
        %v514 = vld [vmem:[%s512 + $0x4] sm:$0xf]
        %v517 = vunpack.c.l.b16 %v510
        %v518 = vunpack.c.l.b16 %v511
        %v519 = vpack.c.b16 %v518, %v517
        %v522 = vunpack.c.l.b16 %v513
        %v523 = vunpack.c.l.b16 %v514
        %v524 = vpack.c.b16 %v523, %v522
        %v527 = vsel %vm355, %v519, 0
        %529 = vmatpush.bf16.msra.mxu0 0
        %530 = vmatpush.bf16.msra.mxu0 0
        %531 = vmatpush.bf16.msra.mxu0 0
        %532 = vmatpush.bf16.msra.mxu0 0
        %533 = vmatpush.bf16.msra.mxu0 0
        %534 = vmatpush.bf16.msra.mxu0 0
        %535 = vmatpush.bf16.msra.mxu0 0
        %536 = vmatpush.bf16.msra.mxu0 %v524
        %537 = vmatmul.bf16.gmra.mxu0 %v527
        %v538 = vpop.f32.mrf.mxu0
        %v539 = vadd.f32 0.0, %v538
        %v540 = vpop.f32.mrf.mxu0
        %v541 = vadd.f32 0.0, %v540
        %542 = vdwg.mxu0
        %v543 = vadd.f32 %v507, %v539
        %v544 = vadd.f32 %v508, %v541
        %s545 = scalar_lea.vmem %s1, 48
        %v546 = vld [vmem:[%s545] sm:$0xf]
        %v547 = vld [vmem:[%s545 + $0x4] sm:$0xf]
        %s548 = scalar_lea.vmem %s299, 48 [#allocation2]
        %v549 = vld [vmem:[%s548] sm:$0xf]
        %v550 = vld [vmem:[%s548 + $0x4] sm:$0xf]
        %v553 = vunpack.c.l.b16 %v546
        %v554 = vunpack.c.l.b16 %v547
        %v555 = vpack.c.b16 %v554, %v553
        %v558 = vunpack.c.l.b16 %v549
        %v559 = vunpack.c.l.b16 %v550
        %v560 = vpack.c.b16 %v559, %v558
        %v563 = vsel %vm355, %v555, 0
        %565 = vmatpush.bf16.msra.mxu0 0
        %566 = vmatpush.bf16.msra.mxu0 0
        %567 = vmatpush.bf16.msra.mxu0 0
        %568 = vmatpush.bf16.msra.mxu0 0
        %569 = vmatpush.bf16.msra.mxu0 0
        %570 = vmatpush.bf16.msra.mxu0 0
        %571 = vmatpush.bf16.msra.mxu0 0
        %572 = vmatpush.bf16.msra.mxu0 %v560
        %573 = vmatmul.bf16.gmra.mxu0 %v563
        %v574 = vpop.f32.mrf.mxu0
        %v575 = vadd.f32 0.0, %v574
        %v576 = vpop.f32.mrf.mxu0
        %v577 = vadd.f32 0.0, %v576
        %578 = vdwg.mxu0
        %v579 = vadd.f32 %v543, %v575
        %v580 = vadd.f32 %v544, %v577
        %s581 = scalar_lea.vmem %s1, 56
        %v582 = vld [vmem:[%s581] sm:$0xf]
        %v583 = vld [vmem:[%s581 + $0x4] sm:$0xf]
        %s584 = scalar_lea.vmem %s299, 56 [#allocation2]
        %v585 = vld [vmem:[%s584] sm:$0xf]
        %v586 = vld [vmem:[%s584 + $0x4] sm:$0xf]
        %v589 = vunpack.c.l.b16 %v582
        %v590 = vunpack.c.l.b16 %v583
        %v591 = vpack.c.b16 %v590, %v589
        %v594 = vunpack.c.l.b16 %v585
        %v595 = vunpack.c.l.b16 %v586
        %v596 = vpack.c.b16 %v595, %v594
        %v599 = vsel %vm355, %v591, 0
        %601 = vmatpush.bf16.msra.mxu0 0
        %602 = vmatpush.bf16.msra.mxu0 0
        %603 = vmatpush.bf16.msra.mxu0 0
        %604 = vmatpush.bf16.msra.mxu0 0
        %605 = vmatpush.bf16.msra.mxu0 0
        %606 = vmatpush.bf16.msra.mxu0 0
        %607 = vmatpush.bf16.msra.mxu0 0
        %608 = vmatpush.bf16.msra.mxu0 %v596
        %609 = vmatmul.bf16.gmra.mxu0 %v599
        %v610 = vpop.f32.mrf.mxu0
        %v611 = vadd.f32 0.0, %v610
        %v612 = vpop.f32.mrf.mxu0
        %v613 = vadd.f32 0.0, %v612
        %614 = vdwg.mxu0
        %v615 = vadd.f32 %v579, %v611
        %v616 = vadd.f32 %v580, %v613
        %s617 = scalar_lea.vmem %s1, 64
        %v618 = vld [vmem:[%s617] sm:$0xf]
        %v619 = vld [vmem:[%s617 + $0x4] sm:$0xf]
        %s620 = scalar_lea.vmem %s299, 64 [#allocation2]
        %v621 = vld [vmem:[%s620] sm:$0xf]
        %v622 = vld [vmem:[%s620 + $0x4] sm:$0xf]
        %v625 = vunpack.c.l.b16 %v618
        %v626 = vunpack.c.l.b16 %v619
        %v627 = vpack.c.b16 %v626, %v625
        %v630 = vunpack.c.l.b16 %v621
        %v631 = vunpack.c.l.b16 %v622
        %v632 = vpack.c.b16 %v631, %v630
        %v635 = vsel %vm355, %v627, 0
        %637 = vmatpush.bf16.msra.mxu0 0
        %638 = vmatpush.bf16.msra.mxu0 0
        %639 = vmatpush.bf16.msra.mxu0 0
        %640 = vmatpush.bf16.msra.mxu0 0
        %641 = vmatpush.bf16.msra.mxu0 0
        %642 = vmatpush.bf16.msra.mxu0 0
        %643 = vmatpush.bf16.msra.mxu0 0
        %644 = vmatpush.bf16.msra.mxu0 %v632
        %645 = vmatmul.bf16.gmra.mxu0 %v635
        %v646 = vpop.f32.mrf.mxu0
        %v647 = vadd.f32 0.0, %v646
        %v648 = vpop.f32.mrf.mxu0
        %v649 = vadd.f32 0.0, %v648
        %650 = vdwg.mxu0
        %v651 = vadd.f32 %v615, %v647
        %v652 = vadd.f32 %v616, %v649
        %v653 = vld [vmem:[%s2] sm:$0xff]
        %v654 = vld [vmem:[%s2 + $0x8] sm:$0xff]
        %656 = vset.pattern.permute.xlu0 0
        %657 = vperm.xlu0 %656, %v653
        %v658 = vpop.permute.xlu0 %657
        %661 = vset.pattern.permute.xlu0 0
        %662 = vperm.xlu0 %661, %v654
        %v663 = vpop.permute.xlu0 %662
        %v665 = vmul.f32 %v651, %v658
        %v666 = vmul.f32 %v652, %v663
        %v667 = vld [vmem:[%s3] sm:$0xff]
        %v668 = vld [vmem:[%s3 + $0x8] sm:$0xff]
        %670 = vset.pattern.permute.xlu0 0
        %671 = vperm.xlu0 %670, %v667
        %v672 = vpop.permute.xlu0 %671
        %675 = vset.pattern.permute.xlu0 0
        %676 = vperm.xlu0 %675, %v668
        %v677 = vpop.permute.xlu0 %676
        %v679 = vadd.f32 %v665, %v672
        %v680 = vadd.f32 %v666, %v677
        %v681 = vmul.f32 %v679, 0.01
        %v682 = vmul.f32 %v680, 0.01
        %v683 = vmax.f32 %v679, %v681
        %v684 = vmax.f32 %v680, %v682
        %vm685 = vcmask 523264
        %686 = vst.msk [vmem:[%s332] sm:$0xff] %vm685, %v683
        %687 = vst.msk [vmem:[%s332 + $0x8] sm:$0xff] %vm685, %v684
        %p688 = scmp.lt.s32.totalorder %s19, 1
        %s689 = scalar_select %p688, %s19, 1
        %p690 = scmp.lt.s32.totalorder %s20, 0
        %s691 = scalar_select %p690, %s20, 0
        %s692 = smul.addr %s689, 2
        %s693 = sadd.s32 %s691, %s692
        %s694 = smul.addr %s693, 8
        %s695 = scalar_lea.vmem %s4, %s694
        // Predicated region
        $region78: #{conv2x_forward.3} parent=72 // pred_check
          %p696 = pneg %p138
        $region79: #{conv2x_forward.3} parent=72 // pred_check_branch
          %698 = sbr.rel (%p696) target = $region81
        $region80: #{conv2x_forward.3} parent=72 // pred_region
          _
        $region81: #{conv2x_forward.3} parent=72 // pred_fallthru
          _
      $region73: #{conv2x_forward.3} parent=5 // pred_fallthru
        _
      %p699 = scmp.le.s32.totalorder 2, %s10
      // Predicated region
      $region82: #{conv2x_forward.3} parent=5 // pred_check
        %p700 = pneg %p699
      $region83: #{conv2x_forward.3} parent=5 // pred_check_branch
        %702 = sbr.rel (%p700) target = $region85
      $region84: #{conv2x_forward.3} parent=5 // pred_region
        %s703 = ssub.s32 %s10, 2
        // Predicated region
        $region86: #{conv2x_forward.3} parent=84 // pred_check
          %p704 = pneg %p144
        $region87: #{conv2x_forward.3} parent=84 // pred_check_branch
          %706 = sbr.rel (%p704) target = $region89
        $region88: #{conv2x_forward.3} parent=84 // pred_region
          %p707 = scmp.lt.s32.totalorder %s21, 1
          %s708 = scalar_select %p707, %s21, 1
          %p709 = scmp.lt.s32.totalorder %s22, 0
          %s710 = scalar_select %p709, %s22, 0
          %s711 = smul.addr %s708, 2
          %s712 = sadd.s32 %s710, %s711
          %s713 = smul.addr %s712, 8
          %s714 = scalar_lea.vmem %s4, %s713
        $region89: #{conv2x_forward.3} parent=84 // pred_fallthru
          _
      $region85: #{conv2x_forward.3} parent=5 // pred_fallthru
        _
    $region6: #{conv2x_forward.3} parent=1 // loop_footer
      %s14 = sadd.s32 1, %s10
    $region7: #{conv2x_forward.3} parent=1 // loop_footer_branch
      %9 = sbr.rel target = $region3
    $region8: #{conv2x_forward.3} parent=1 // loop_exit
      _

</llo_original>
